<compile_context>
chip_gen: v5e
topology: v5e:2x2
jax: 0.10.0
libtpu: 0.0.40
codegen_flags: <defaults>
</compile_context>

<pallas_src>
import functools

import jax
import jax.numpy as jnp
import numpy as np
from jax.experimental import pallas as pl


# ----------------------------------------------------------------------------
# Fused Pallas kernel: the whole InferCell on lane-dense (N*H, W*C) activations
# ----------------------------------------------------------------------------
def _mm(a, b):
    return jnp.dot(a, b, preferred_element_type=jnp.float32)


def _infer_cell_kernel(x_ref, sd_ref, su_ref, sp_ref,
                       b1_ref, g1_ref, be1_ref,
                       b2_ref, g2_ref, be2_ref,
                       b3_ref, g3_ref, be3_ref,
                       ap_ref, pm_ref, o_ref, *, inv_cnt):
    x = x_ref[...]       # (NH, WC) raw node0
    sd = sd_ref[...]     # (NH, NH) row shift to h-1 (zero row at h == 0)
    su = su_ref[...]     # (NH, NH) row shift to h+1 (zero row at h == H-1)
    pm = pm_ref[...]     # (WC, WC) 0/1 channel projection: lane j sums channel j % C

    def bn(y, g_ref, be_ref):
        # BatchNorm2d with training-mode batch stats; two-pass (stable) variance.
        mean = jnp.sum(_mm(y, pm), axis=0, keepdims=True) * inv_cnt      # (1, WC)
        d = y - mean
        var = jnp.sum(_mm(d * d, pm), axis=0, keepdims=True) * inv_cnt   # (1, WC)
        return d * jax.lax.rsqrt(var + 1e-5) * g_ref[...] + be_ref[...]

    def relu_conv3x3_bn(v, b_ref, g_ref, be_ref):
        r = jnp.maximum(v, 0.0)
        rd = _mm(sd, r)                      # rows at h-1, zero-padded at the top edge
        ru = _mm(su, r)                      # rows at h+1, zero-padded at the bottom edge
        y = _mm(rd, b_ref[0]) + _mm(r, b_ref[1]) + _mm(ru, b_ref[2])
        return bn(y, g_ref, be_ref)

    # node1 = nor_conv_3x3(node0)
    n1 = relu_conv3x3_bn(x, b1_ref, g1_ref, be1_ref)
    # node2 = nor_conv_1x1(node0) + skip_connect(node1)
    n2 = bn(_mm(jnp.maximum(x, 0.0), b2_ref[...]), g2_ref, be2_ref) + n1
    # node3 = avg_pool_3x3(node0) + nor_conv_3x3(node1) + skip_connect(node2)
    pool = _mm(_mm(sp_ref[...], x), ap_ref[...])
    n3 = pool + relu_conv3x3_bn(n1, b3_ref, g3_ref, be3_ref) + n2
    o_ref[...] = n3                          # dense (NH, 128) store


# ----------------------------------------------------------------------------
# Wrapper-side one-time matrix construction (pure setup, outside the kernel)
# ----------------------------------------------------------------------------
def _banded_conv3x3(w_hwio, W):
    """(3,3,C,C) HWIO weight -> (3, W*C, W*C) banded matrices.

    B[kh][(wi*C+ci), (wo*C+co)] = w[kh, wi-wo+1, ci, co] (0 outside the band), so
    out_row(h) = sum_kh row(h+kh-1) @ B[kh]; W-direction zero padding is implicit.
    """
    return jnp.stack([
        sum(jnp.kron(jnp.eye(W, k=1 - kw, dtype=jnp.float32), w_hwio[kh, kw])
            for kw in range(3))
        for kh in range(3)])


def _blockdiag_conv1x1(w_hwio, W):
    return jnp.kron(jnp.eye(W, dtype=jnp.float32), w_hwio[0, 0])


def _shift_and_pool_row_mats(N, H):
    """0/1 row-shift matrices (H-direction padding) and the pool row matrix."""
    NH = N * H
    r = np.arange(NH)
    keep_dn = (r % H != 0).astype(np.float32)[:, None]
    keep_up = (r % H != H - 1).astype(np.float32)[:, None]
    sd = np.eye(NH, k=-1, dtype=np.float32) * keep_dn
    su = np.eye(NH, k=1, dtype=np.float32) * keep_up
    ch = 1.0 + keep_dn + keep_up                       # valid rows in 3-row window (2 or 3)
    sp = (sd + np.eye(NH, dtype=np.float32) + su) / ch  # 1/ch folded in (count_include_pad=False)
    return jnp.asarray(sd), jnp.asarray(su), jnp.asarray(sp)


def _pool_col_mat(W, C):
    band = sum(np.eye(W, k=k, dtype=np.float32) for k in (-1, 0, 1))   # |wi - wo| <= 1
    cw = band.sum(axis=0)                                              # 2 or 3 per output w
    return jnp.asarray(np.kron(band / cw[None, :], np.eye(C, dtype=np.float32)))


def _channel_proj(W, C):
    return jnp.asarray(np.kron(np.ones((W, W), np.float32), np.eye(C, dtype=np.float32)))


# ----------------------------------------------------------------------------
# InferCell forward (fixed genotype described at the top of the file)
# ----------------------------------------------------------------------------
def infer_cell_forward(x_nhwc, p):
    N, H, W, C = x_nhwc.shape
    NH, WC = N * H, W * C
    x2 = x_nhwc.reshape(NH, WC)                     # lane-dense view (contiguous, free)

    sd, su, sp = _shift_and_pool_row_mats(N, H)
    ap = _pool_col_mat(W, C)
    pm = _channel_proj(W, C)
    tile = lambda v: jnp.tile(v, W).reshape(1, WC)  # per-channel -> per-lane BN params

    out2 = pl.pallas_call(
        functools.partial(_infer_cell_kernel, inv_cnt=1.0 / (N * H * W)),
        out_shape=jax.ShapeDtypeStruct((NH, WC), jnp.float32),
        # No grid / BlockSpecs: every operand is a single whole-array VMEM block
        # (< 1 MiB total, far below the scoped VMEM limit on v5e/v6e/v7x).
    )(x2, sd, su, sp,
      _banded_conv3x3(p["w1"], W), tile(p["g1"]), tile(p["b1"]),
      _blockdiag_conv1x1(p["w2"], W), tile(p["g2"]), tile(p["b2"]),
      _banded_conv3x3(p["w3"], W), tile(p["g3"]), tile(p["b3"]),
      ap, pm)
    return out2.reshape(N, H, W, C)


# ----------------------------------------------------------------------------
# Pure-JAX reference (verification only)
# ----------------------------------------------------------------------------
def _ref_relu_conv_bn(x, w_hwio, gamma, beta, pad):
    xr = jnp.maximum(x, 0.0)
    y = jax.lax.conv_general_dilated(
        xr, w_hwio, (1, 1), [(pad, pad), (pad, pad)],
        dimension_numbers=("NHWC", "HWIO", "NHWC"))
    mean = jnp.mean(y, axis=(0, 1, 2))
    var = jnp.mean((y - mean) ** 2, axis=(0, 1, 2))
    return (y - mean) * jax.lax.rsqrt(var + 1e-5) * gamma + beta


def _ref_avg_pool(x):
    wdims, strides = (1, 3, 3, 1), (1, 1, 1, 1)
    padding = [(0, 0), (1, 1), (1, 1), (0, 0)]
    s = jax.lax.reduce_window(x, 0.0, jax.lax.add, wdims, strides, padding)
    ones = jnp.ones_like(x[..., :1])
    c = jax.lax.reduce_window(ones, 0.0, jax.lax.add, wdims, strides, padding)
    return s / c


def _ref_infer_cell(x, p):
    n0 = x
    n1 = _ref_relu_conv_bn(n0, p["w1"], p["g1"], p["b1"], 1)
    n2 = _ref_relu_conv_bn(n0, p["w2"], p["g2"], p["b2"], 0) + n1
    n3 = _ref_avg_pool(n0) + _ref_relu_conv_bn(n1, p["w3"], p["g3"], p["b3"], 1) + n2
    return n3


# ----------------------------------------------------------------------------
if __name__ == "__main__":
    key = jax.random.PRNGKey(0)
    keys = jax.random.split(key, 10)

    N, C, H, W = 2, 8, 16, 16                # PyTorch-style NCHW; W*C = 128 (lane-dense)
    x_nchw = jax.random.normal(keys[0], (N, C, H, W), jnp.float32)
    x = jnp.transpose(x_nchw, (0, 2, 3, 1))  # -> NHWC for the kernel

    params = {
        # conv weights stored as HWIO (kh, kw, Cin, Cout)
        "w1": 0.2 * jax.random.normal(keys[1], (3, 3, C, C), jnp.float32),
        "g1": 1.0 + 0.1 * jax.random.normal(keys[2], (C,), jnp.float32),
        "b1": 0.1 * jax.random.normal(keys[3], (C,), jnp.float32),
        "w2": 0.3 * jax.random.normal(keys[4], (1, 1, C, C), jnp.float32),
        "g2": 1.0 + 0.1 * jax.random.normal(keys[5], (C,), jnp.float32),
        "b2": 0.1 * jax.random.normal(keys[6], (C,), jnp.float32),
        "w3": 0.2 * jax.random.normal(keys[7], (3, 3, C, C), jnp.float32),
        "g3": 1.0 + 0.1 * jax.random.normal(keys[8], (C,), jnp.float32),
        "b3": 0.1 * jax.random.normal(keys[9], (C,), jnp.float32),
    }

    out = infer_cell_forward(x, params)
    out = jax.block_until_ready(out)

    ref = _ref_infer_cell(x, params)
    np.testing.assert_allclose(np.asarray(out), np.asarray(ref),
                               rtol=2e-2, atol=2e-2)
    print("KERNEL_OK")
</pallas_src>

<mosaic_0001>
module attributes {stable_mosaic.version = 11 : i64} {
  func.func @_infer_cell_kernel(%arg0: memref<32x128xf32, #tpu.memory_space<vmem>>, %arg1: memref<32x32xf32, #tpu.memory_space<vmem>>, %arg2: memref<32x32xf32, #tpu.memory_space<vmem>>, %arg3: memref<32x32xf32, #tpu.memory_space<vmem>>, %arg4: memref<3x128x128xf32, #tpu.memory_space<vmem>>, %arg5: memref<1x128xf32, #tpu.memory_space<vmem>>, %arg6: memref<1x128xf32, #tpu.memory_space<vmem>>, %arg7: memref<128x128xf32, #tpu.memory_space<vmem>>, %arg8: memref<1x128xf32, #tpu.memory_space<vmem>>, %arg9: memref<1x128xf32, #tpu.memory_space<vmem>>, %arg10: memref<3x128x128xf32, #tpu.memory_space<vmem>>, %arg11: memref<1x128xf32, #tpu.memory_space<vmem>>, %arg12: memref<1x128xf32, #tpu.memory_space<vmem>>, %arg13: memref<128x128xf32, #tpu.memory_space<vmem>>, %arg14: memref<128x128xf32, #tpu.memory_space<vmem>>, %arg15: memref<32x128xf32, #tpu.memory_space<vmem>>) attributes {dimension_semantics = [], scalar_prefetch = 0 : i64, scratch_operands = 0 : i64, tpu.core_type = #tpu.core_type<tc>} {
    %c0 = arith.constant 0 : index
    %c0_0 = arith.constant 0 : index
    %0 = vector.load %arg0[%c0, %c0_0] : memref<32x128xf32, #tpu.memory_space<vmem>>, vector<32x128xf32>
    %c0_1 = arith.constant 0 : index
    %c0_2 = arith.constant 0 : index
    %1 = vector.load %arg1[%c0_1, %c0_2] : memref<32x32xf32, #tpu.memory_space<vmem>>, vector<32x32xf32>
    %c0_3 = arith.constant 0 : index
    %c0_4 = arith.constant 0 : index
    %2 = vector.load %arg2[%c0_3, %c0_4] : memref<32x32xf32, #tpu.memory_space<vmem>>, vector<32x32xf32>
    %c0_5 = arith.constant 0 : index
    %c0_6 = arith.constant 0 : index
    %3 = vector.load %arg14[%c0_5, %c0_6] : memref<128x128xf32, #tpu.memory_space<vmem>>, vector<128x128xf32>
    %cst = arith.constant 0.000000e+00 : f32
    %4 = vector.broadcast %cst : f32 to vector<32x128xf32>
    %5 = arith.maximumf %0, %4 : vector<32x128xf32>
    %cst_7 = arith.constant dense<0.000000e+00> : vector<32x128xf32>
    %6 = tpu.matmul %1, %5, %cst_7 {dimension_numbers = #tpu.dot_dimension_numbers<[1], [0], [0], [1], [0, 0, 1, 1], [], []>} : vector<32x32xf32>, vector<32x128xf32>, vector<32x128xf32> -> vector<32x128xf32>
    %cst_8 = arith.constant dense<0.000000e+00> : vector<32x128xf32>
    %7 = tpu.matmul %2, %5, %cst_8 {dimension_numbers = #tpu.dot_dimension_numbers<[1], [0], [0], [1], [0, 0, 1, 1], [], []>} : vector<32x32xf32>, vector<32x128xf32>, vector<32x128xf32> -> vector<32x128xf32>
    %c0_9 = arith.constant 0 : index
    %c0_10 = arith.constant 0 : index
    %c0_11 = arith.constant 0 : index
    %8 = vector.load %arg4[%c0_9, %c0_10, %c0_11] : memref<3x128x128xf32, #tpu.memory_space<vmem>>, vector<1x128x128xf32>
    %9 = vector.shape_cast %8 : vector<1x128x128xf32> to vector<128x128xf32>
    %cst_12 = arith.constant dense<0.000000e+00> : vector<32x128xf32>
    %10 = tpu.matmul %6, %9, %cst_12 {dimension_numbers = #tpu.dot_dimension_numbers<[1], [0], [0], [1], [0, 0, 1, 1], [], []>} : vector<32x128xf32>, vector<128x128xf32>, vector<32x128xf32> -> vector<32x128xf32>
    %c1 = arith.constant 1 : index
    %c0_13 = arith.constant 0 : index
    %c0_14 = arith.constant 0 : index
    %11 = vector.load %arg4[%c1, %c0_13, %c0_14] : memref<3x128x128xf32, #tpu.memory_space<vmem>>, vector<1x128x128xf32>
    %12 = vector.shape_cast %11 : vector<1x128x128xf32> to vector<128x128xf32>
    %cst_15 = arith.constant dense<0.000000e+00> : vector<32x128xf32>
    %13 = tpu.matmul %5, %12, %cst_15 {dimension_numbers = #tpu.dot_dimension_numbers<[1], [0], [0], [1], [0, 0, 1, 1], [], []>} : vector<32x128xf32>, vector<128x128xf32>, vector<32x128xf32> -> vector<32x128xf32>
    %14 = arith.addf %10, %13 : vector<32x128xf32>
    %c2 = arith.constant 2 : index
    %c0_16 = arith.constant 0 : index
    %c0_17 = arith.constant 0 : index
    %15 = vector.load %arg4[%c2, %c0_16, %c0_17] : memref<3x128x128xf32, #tpu.memory_space<vmem>>, vector<1x128x128xf32>
    %16 = vector.shape_cast %15 : vector<1x128x128xf32> to vector<128x128xf32>
    %cst_18 = arith.constant dense<0.000000e+00> : vector<32x128xf32>
    %17 = tpu.matmul %7, %16, %cst_18 {dimension_numbers = #tpu.dot_dimension_numbers<[1], [0], [0], [1], [0, 0, 1, 1], [], []>} : vector<32x128xf32>, vector<128x128xf32>, vector<32x128xf32> -> vector<32x128xf32>
    %18 = arith.addf %14, %17 : vector<32x128xf32>
    %cst_19 = arith.constant dense<0.000000e+00> : vector<32x128xf32>
    %19 = tpu.matmul %18, %3, %cst_19 {dimension_numbers = #tpu.dot_dimension_numbers<[1], [0], [0], [1], [0, 0, 1, 1], [], []>} : vector<32x128xf32>, vector<128x128xf32>, vector<32x128xf32> -> vector<32x128xf32>
    %cst_20 = arith.constant dense<0.000000e+00> : vector<128xf32>
    %20 = vector.multi_reduction <add>, %19, %cst_20 [0] : vector<32x128xf32> to vector<128xf32>
    %21 = vector.shape_cast %20 : vector<128xf32> to vector<1x128xf32>
    %cst_21 = arith.constant 0.001953125 : f32
    %22 = vector.broadcast %cst_21 : f32 to vector<1x128xf32>
    %23 = arith.mulf %21, %22 : vector<1x128xf32>
    %24 = vector.broadcast %23 : vector<1x128xf32> to vector<32x128xf32>
    %25 = arith.subf %18, %24 : vector<32x128xf32>
    %26 = arith.mulf %25, %25 : vector<32x128xf32>
    %cst_22 = arith.constant dense<0.000000e+00> : vector<32x128xf32>
    %27 = tpu.matmul %26, %3, %cst_22 {dimension_numbers = #tpu.dot_dimension_numbers<[1], [0], [0], [1], [0, 0, 1, 1], [], []>} : vector<32x128xf32>, vector<128x128xf32>, vector<32x128xf32> -> vector<32x128xf32>
    %cst_23 = arith.constant dense<0.000000e+00> : vector<128xf32>
    %28 = vector.multi_reduction <add>, %27, %cst_23 [0] : vector<32x128xf32> to vector<128xf32>
    %29 = vector.shape_cast %28 : vector<128xf32> to vector<1x128xf32>
    %cst_24 = arith.constant 0.001953125 : f32
    %30 = vector.broadcast %cst_24 : f32 to vector<1x128xf32>
    %31 = arith.mulf %29, %30 : vector<1x128xf32>
    %cst_25 = arith.constant 9.99999974E-6 : f32
    %32 = vector.broadcast %cst_25 : f32 to vector<1x128xf32>
    %33 = arith.addf %31, %32 : vector<1x128xf32>
    %34 = math.rsqrt %33 : vector<1x128xf32>
    %35 = vector.broadcast %34 : vector<1x128xf32> to vector<32x128xf32>
    %36 = arith.mulf %25, %35 : vector<32x128xf32>
    %c0_26 = arith.constant 0 : index
    %c0_27 = arith.constant 0 : index
    %37 = vector.load %arg5[%c0_26, %c0_27] : memref<1x128xf32, #tpu.memory_space<vmem>>, vector<1x128xf32>
    %38 = vector.broadcast %37 : vector<1x128xf32> to vector<32x128xf32>
    %39 = arith.mulf %36, %38 : vector<32x128xf32>
    %c0_28 = arith.constant 0 : index
    %c0_29 = arith.constant 0 : index
    %40 = vector.load %arg6[%c0_28, %c0_29] : memref<1x128xf32, #tpu.memory_space<vmem>>, vector<1x128xf32>
    %41 = vector.broadcast %40 : vector<1x128xf32> to vector<32x128xf32>
    %42 = arith.addf %39, %41 : vector<32x128xf32>
    %cst_30 = arith.constant 0.000000e+00 : f32
    %43 = vector.broadcast %cst_30 : f32 to vector<32x128xf32>
    %44 = arith.maximumf %0, %43 : vector<32x128xf32>
    %c0_31 = arith.constant 0 : index
    %c0_32 = arith.constant 0 : index
    %45 = vector.load %arg7[%c0_31, %c0_32] : memref<128x128xf32, #tpu.memory_space<vmem>>, vector<128x128xf32>
    %cst_33 = arith.constant dense<0.000000e+00> : vector<32x128xf32>
    %46 = tpu.matmul %44, %45, %cst_33 {dimension_numbers = #tpu.dot_dimension_numbers<[1], [0], [0], [1], [0, 0, 1, 1], [], []>} : vector<32x128xf32>, vector<128x128xf32>, vector<32x128xf32> -> vector<32x128xf32>
    %cst_34 = arith.constant dense<0.000000e+00> : vector<32x128xf32>
    %47 = tpu.matmul %46, %3, %cst_34 {dimension_numbers = #tpu.dot_dimension_numbers<[1], [0], [0], [1], [0, 0, 1, 1], [], []>} : vector<32x128xf32>, vector<128x128xf32>, vector<32x128xf32> -> vector<32x128xf32>
    %cst_35 = arith.constant dense<0.000000e+00> : vector<128xf32>
    %48 = vector.multi_reduction <add>, %47, %cst_35 [0] : vector<32x128xf32> to vector<128xf32>
    %49 = vector.shape_cast %48 : vector<128xf32> to vector<1x128xf32>
    %cst_36 = arith.constant 0.001953125 : f32
    %50 = vector.broadcast %cst_36 : f32 to vector<1x128xf32>
    %51 = arith.mulf %49, %50 : vector<1x128xf32>
    %52 = vector.broadcast %51 : vector<1x128xf32> to vector<32x128xf32>
    %53 = arith.subf %46, %52 : vector<32x128xf32>
    %54 = arith.mulf %53, %53 : vector<32x128xf32>
    %cst_37 = arith.constant dense<0.000000e+00> : vector<32x128xf32>
    %55 = tpu.matmul %54, %3, %cst_37 {dimension_numbers = #tpu.dot_dimension_numbers<[1], [0], [0], [1], [0, 0, 1, 1], [], []>} : vector<32x128xf32>, vector<128x128xf32>, vector<32x128xf32> -> vector<32x128xf32>
    %cst_38 = arith.constant dense<0.000000e+00> : vector<128xf32>
    %56 = vector.multi_reduction <add>, %55, %cst_38 [0] : vector<32x128xf32> to vector<128xf32>
    %57 = vector.shape_cast %56 : vector<128xf32> to vector<1x128xf32>
    %cst_39 = arith.constant 0.001953125 : f32
    %58 = vector.broadcast %cst_39 : f32 to vector<1x128xf32>
    %59 = arith.mulf %57, %58 : vector<1x128xf32>
    %cst_40 = arith.constant 9.99999974E-6 : f32
    %60 = vector.broadcast %cst_40 : f32 to vector<1x128xf32>
    %61 = arith.addf %59, %60 : vector<1x128xf32>
    %62 = math.rsqrt %61 : vector<1x128xf32>
    %63 = vector.broadcast %62 : vector<1x128xf32> to vector<32x128xf32>
    %64 = arith.mulf %53, %63 : vector<32x128xf32>
    %c0_41 = arith.constant 0 : index
    %c0_42 = arith.constant 0 : index
    %65 = vector.load %arg8[%c0_41, %c0_42] : memref<1x128xf32, #tpu.memory_space<vmem>>, vector<1x128xf32>
    %66 = vector.broadcast %65 : vector<1x128xf32> to vector<32x128xf32>
    %67 = arith.mulf %64, %66 : vector<32x128xf32>
    %c0_43 = arith.constant 0 : index
    %c0_44 = arith.constant 0 : index
    %68 = vector.load %arg9[%c0_43, %c0_44] : memref<1x128xf32, #tpu.memory_space<vmem>>, vector<1x128xf32>
    %69 = vector.broadcast %68 : vector<1x128xf32> to vector<32x128xf32>
    %70 = arith.addf %67, %69 : vector<32x128xf32>
    %71 = arith.addf %70, %42 : vector<32x128xf32>
    %c0_45 = arith.constant 0 : index
    %c0_46 = arith.constant 0 : index
    %72 = vector.load %arg3[%c0_45, %c0_46] : memref<32x32xf32, #tpu.memory_space<vmem>>, vector<32x32xf32>
    %cst_47 = arith.constant dense<0.000000e+00> : vector<32x128xf32>
    %73 = tpu.matmul %72, %0, %cst_47 {dimension_numbers = #tpu.dot_dimension_numbers<[1], [0], [0], [1], [0, 0, 1, 1], [], []>} : vector<32x32xf32>, vector<32x128xf32>, vector<32x128xf32> -> vector<32x128xf32>
    %c0_48 = arith.constant 0 : index
    %c0_49 = arith.constant 0 : index
    %74 = vector.load %arg13[%c0_48, %c0_49] : memref<128x128xf32, #tpu.memory_space<vmem>>, vector<128x128xf32>
    %cst_50 = arith.constant dense<0.000000e+00> : vector<32x128xf32>
    %75 = tpu.matmul %73, %74, %cst_50 {dimension_numbers = #tpu.dot_dimension_numbers<[1], [0], [0], [1], [0, 0, 1, 1], [], []>} : vector<32x128xf32>, vector<128x128xf32>, vector<32x128xf32> -> vector<32x128xf32>
    %cst_51 = arith.constant 0.000000e+00 : f32
    %76 = vector.broadcast %cst_51 : f32 to vector<32x128xf32>
    %77 = arith.maximumf %42, %76 : vector<32x128xf32>
    %cst_52 = arith.constant dense<0.000000e+00> : vector<32x128xf32>
    %78 = tpu.matmul %1, %77, %cst_52 {dimension_numbers = #tpu.dot_dimension_numbers<[1], [0], [0], [1], [0, 0, 1, 1], [], []>} : vector<32x32xf32>, vector<32x128xf32>, vector<32x128xf32> -> vector<32x128xf32>
    %cst_53 = arith.constant dense<0.000000e+00> : vector<32x128xf32>
    %79 = tpu.matmul %2, %77, %cst_53 {dimension_numbers = #tpu.dot_dimension_numbers<[1], [0], [0], [1], [0, 0, 1, 1], [], []>} : vector<32x32xf32>, vector<32x128xf32>, vector<32x128xf32> -> vector<32x128xf32>
    %c0_54 = arith.constant 0 : index
    %c0_55 = arith.constant 0 : index
    %c0_56 = arith.constant 0 : index
    %80 = vector.load %arg10[%c0_54, %c0_55, %c0_56] : memref<3x128x128xf32, #tpu.memory_space<vmem>>, vector<1x128x128xf32>
    %81 = vector.shape_cast %80 : vector<1x128x128xf32> to vector<128x128xf32>
    %cst_57 = arith.constant dense<0.000000e+00> : vector<32x128xf32>
    %82 = tpu.matmul %78, %81, %cst_57 {dimension_numbers = #tpu.dot_dimension_numbers<[1], [0], [0], [1], [0, 0, 1, 1], [], []>} : vector<32x128xf32>, vector<128x128xf32>, vector<32x128xf32> -> vector<32x128xf32>
    %c1_58 = arith.constant 1 : index
    %c0_59 = arith.constant 0 : index
    %c0_60 = arith.constant 0 : index
    %83 = vector.load %arg10[%c1_58, %c0_59, %c0_60] : memref<3x128x128xf32, #tpu.memory_space<vmem>>, vector<1x128x128xf32>
    %84 = vector.shape_cast %83 : vector<1x128x128xf32> to vector<128x128xf32>
    %cst_61 = arith.constant dense<0.000000e+00> : vector<32x128xf32>
    %85 = tpu.matmul %77, %84, %cst_61 {dimension_numbers = #tpu.dot_dimension_numbers<[1], [0], [0], [1], [0, 0, 1, 1], [], []>} : vector<32x128xf32>, vector<128x128xf32>, vector<32x128xf32> -> vector<32x128xf32>
    %86 = arith.addf %82, %85 : vector<32x128xf32>
    %c2_62 = arith.constant 2 : index
    %c0_63 = arith.constant 0 : index
    %c0_64 = arith.constant 0 : index
    %87 = vector.load %arg10[%c2_62, %c0_63, %c0_64] : memref<3x128x128xf32, #tpu.memory_space<vmem>>, vector<1x128x128xf32>
    %88 = vector.shape_cast %87 : vector<1x128x128xf32> to vector<128x128xf32>
    %cst_65 = arith.constant dense<0.000000e+00> : vector<32x128xf32>
    %89 = tpu.matmul %79, %88, %cst_65 {dimension_numbers = #tpu.dot_dimension_numbers<[1], [0], [0], [1], [0, 0, 1, 1], [], []>} : vector<32x128xf32>, vector<128x128xf32>, vector<32x128xf32> -> vector<32x128xf32>
    %90 = arith.addf %86, %89 : vector<32x128xf32>
    %cst_66 = arith.constant dense<0.000000e+00> : vector<32x128xf32>
    %91 = tpu.matmul %90, %3, %cst_66 {dimension_numbers = #tpu.dot_dimension_numbers<[1], [0], [0], [1], [0, 0, 1, 1], [], []>} : vector<32x128xf32>, vector<128x128xf32>, vector<32x128xf32> -> vector<32x128xf32>
    %cst_67 = arith.constant dense<0.000000e+00> : vector<128xf32>
    %92 = vector.multi_reduction <add>, %91, %cst_67 [0] : vector<32x128xf32> to vector<128xf32>
    %93 = vector.shape_cast %92 : vector<128xf32> to vector<1x128xf32>
    %cst_68 = arith.constant 0.001953125 : f32
    %94 = vector.broadcast %cst_68 : f32 to vector<1x128xf32>
    %95 = arith.mulf %93, %94 : vector<1x128xf32>
    %96 = vector.broadcast %95 : vector<1x128xf32> to vector<32x128xf32>
    %97 = arith.subf %90, %96 : vector<32x128xf32>
    %98 = arith.mulf %97, %97 : vector<32x128xf32>
    %cst_69 = arith.constant dense<0.000000e+00> : vector<32x128xf32>
    %99 = tpu.matmul %98, %3, %cst_69 {dimension_numbers = #tpu.dot_dimension_numbers<[1], [0], [0], [1], [0, 0, 1, 1], [], []>} : vector<32x128xf32>, vector<128x128xf32>, vector<32x128xf32> -> vector<32x128xf32>
    %cst_70 = arith.constant dense<0.000000e+00> : vector<128xf32>
    %100 = vector.multi_reduction <add>, %99, %cst_70 [0] : vector<32x128xf32> to vector<128xf32>
    %101 = vector.shape_cast %100 : vector<128xf32> to vector<1x128xf32>
    %cst_71 = arith.constant 0.001953125 : f32
    %102 = vector.broadcast %cst_71 : f32 to vector<1x128xf32>
    %103 = arith.mulf %101, %102 : vector<1x128xf32>
    %cst_72 = arith.constant 9.99999974E-6 : f32
    %104 = vector.broadcast %cst_72 : f32 to vector<1x128xf32>
    %105 = arith.addf %103, %104 : vector<1x128xf32>
    %106 = math.rsqrt %105 : vector<1x128xf32>
    %107 = vector.broadcast %106 : vector<1x128xf32> to vector<32x128xf32>
    %108 = arith.mulf %97, %107 : vector<32x128xf32>
    %c0_73 = arith.constant 0 : index
    %c0_74 = arith.constant 0 : index
    %109 = vector.load %arg11[%c0_73, %c0_74] : memref<1x128xf32, #tpu.memory_space<vmem>>, vector<1x128xf32>
    %110 = vector.broadcast %109 : vector<1x128xf32> to vector<32x128xf32>
    %111 = arith.mulf %108, %110 : vector<32x128xf32>
    %c0_75 = arith.constant 0 : index
    %c0_76 = arith.constant 0 : index
    %112 = vector.load %arg12[%c0_75, %c0_76] : memref<1x128xf32, #tpu.memory_space<vmem>>, vector<1x128xf32>
    %113 = vector.broadcast %112 : vector<1x128xf32> to vector<32x128xf32>
    %114 = arith.addf %111, %113 : vector<32x128xf32>
    %115 = arith.addf %75, %114 : vector<32x128xf32>
    %116 = arith.addf %115, %71 : vector<32x128xf32>
    %c0_77 = arith.constant 0 : index
    %c0_78 = arith.constant 0 : index
    %117 = vector.load %arg15[%c0_77, %c0_78] : memref<32x128xf32, #tpu.memory_space<vmem>>, vector<32x128xf32>
    tpu.vector_store %arg15[%c0_77, %c0_78], %116 {strides = array<i32>} : memref<32x128xf32, #tpu.memory_space<vmem>>, vector<32x128xf32>,
    return
  }
}

</mosaic_0001>

<llo_original>
// kernel: tpu_custom_call.1
$region0: #{tpu_custom_call.1}
  #allocation0 [shape = 'u32[]', space=smem, size = 0x4, offset = 0x4, fixed_abs, tag = 'smem constant byte address 0x4 - core index']
  #allocation1 [shape = 'u32[72,128]{1,0:T(1,128)}', space=vmem, size = 0x9000, scoped, tag = 'internal scratch']
  %s0 = inlined_call_operand.hbm [shape: f32[32,128], index: 0, kind: input, shape index: {}]
  %s1 = inlined_call_operand.hbm [shape: f32[32,32], index: 1, kind: input, shape index: {}]
  %s2 = inlined_call_operand.hbm [shape: f32[32,32], index: 2, kind: input, shape index: {}]
  %s3 = inlined_call_operand.hbm [shape: f32[32,32], index: 3, kind: input, shape index: {}]
  %s4 = inlined_call_operand.hbm [shape: f32[3,128,128], index: 4, kind: input, shape index: {}]
  %s5 = inlined_call_operand.vmem [shape: f32[1,128], index: 5, kind: input, shape index: {}]
  %s6 = inlined_call_operand.vmem [shape: f32[1,128], index: 6, kind: input, shape index: {}]
  %s7 = inlined_call_operand.hbm [shape: f32[128,128], index: 7, kind: input, shape index: {}]
  %s8 = inlined_call_operand.vmem [shape: f32[1,128], index: 8, kind: input, shape index: {}]
  %s9 = inlined_call_operand.vmem [shape: f32[1,128], index: 9, kind: input, shape index: {}]
  %s10 = inlined_call_operand.hbm [shape: f32[3,128,128], index: 10, kind: input, shape index: {}]
  %s11 = inlined_call_operand.vmem [shape: f32[1,128], index: 11, kind: input, shape index: {}]
  %s12 = inlined_call_operand.vmem [shape: f32[1,128], index: 12, kind: input, shape index: {}]
  %s13 = inlined_call_operand.hbm [shape: f32[128,128], index: 13, kind: input, shape index: {}]
  %s14 = inlined_call_operand.hbm [shape: f32[128,128], index: 14, kind: input, shape index: {}]
  %s15 = inlined_call_operand.hbm [shape: f32[32,128], index: 15, kind: output, shape index: {}]
  %s16 = sld [smem:[#allocation0]]
  $region106: #{tpu_custom_call.1} parent=0
    _
  %s18 = ssub.s32 1, %s16
  %s19 = scalar_select 0, %s18, %s16
  $region1: #{tpu_custom_call.1} parent=0
    #allocation2 [shape = 'u8[16384]{0}', space=vmem, size = 0x4000, scoped, tag = 'input window, operand 0, single buffered']
    #allocation3 [shape = 's32[1]{0}', space=sflag, size = 0x4, scoped, tag = 'scoped memory for tpu_custom_call.1']
    #allocation4 [shape = 's32[1]{0}', space=sflag, size = 0x4, scoped, tag = 'scoped memory for tpu_custom_call.1']
    #allocation5 [shape = 'u8[16384]{0}', space=vmem, size = 0x4000, scoped, tag = 'input window, operand 1, single buffered']
    #allocation6 [shape = 's32[1]{0}', space=sflag, size = 0x4, scoped, tag = 'scoped memory for tpu_custom_call.1']
    #allocation7 [shape = 'u8[16384]{0}', space=vmem, size = 0x4000, scoped, tag = 'input window, operand 2, single buffered']
    #allocation8 [shape = 'u8[16384]{0}', space=vmem, size = 0x4000, scoped, tag = 'input window, operand 3, single buffered']
    #allocation9 [shape = 's32[1]{0}', space=sflag, size = 0x4, scoped, tag = 'scoped memory for tpu_custom_call.1']
    #allocation10 [shape = 'u8[196608]{0}', space=vmem, size = 0x30000, scoped, tag = 'input window, operand 4, single buffered']
    #allocation11 [shape = 'u8[65536]{0}', space=vmem, size = 0x10000, scoped, tag = 'input window, operand 7, single buffered']
    #allocation12 [shape = 's32[1]{0}', space=sflag, size = 0x4, scoped, tag = 'scoped memory for tpu_custom_call.1']
    #allocation13 [shape = 'u8[196608]{0}', space=vmem, size = 0x30000, scoped, tag = 'input window, operand 10, single buffered']
    #allocation14 [shape = 'u8[65536]{0}', space=vmem, size = 0x10000, scoped, tag = 'input window, operand 13, single buffered']
    #allocation15 [shape = 's32[1]{0}', space=sflag, size = 0x4, scoped, tag = 'scoped memory for tpu_custom_call.1']
    #allocation16 [shape = 'u8[65536]{0}', space=vmem, size = 0x10000, scoped, tag = 'input window, operand 14, single buffered']
    #allocation17 [shape = 'u8[16384]{0}', space=vmem, size = 0x4000, scoped, tag = 'output window, operand 0, single buffered']
    %20 = vsyncpa [#allocation3], 0
    %21 = vsyncpa [#allocation6], 0
    %22 = vsyncpa [#allocation9], 0
    %23 = vsyncpa [#allocation12], 0
    %24 = vsyncpa [#allocation15], 0
    %25 = vsyncpa [#allocation4], 0
    // Predicated region
    $region2: #{tpu_custom_call.1} parent=1 // pred_check
      _
    $region3: #{tpu_custom_call.1} parent=1 // pred_check_branch
      %27 = sbr.rel (0) target = $region5
    $region4: #{tpu_custom_call.1} parent=1 // pred_region
      %29 = vsyncadd [#allocation3], 0
      %s30 = sshll.u32 %s0, 4
      %s31 = int_to_ptr.hbm [resolvable:$true] %s30
      %s32 = sshll.u32 [#allocation2], 4
      %s33 = int_to_ptr.vmem [resolvable:$true] %s32
      %38 = dma.hbm_to_vmem [thread:$0]  %s31, 512, %s33, [#allocation3], 128, 128, 8
    $region5: #{tpu_custom_call.1} parent=1 // pred_fallthru
      _
    // Predicated region
    $region6: #{tpu_custom_call.1} parent=1 // pred_check
      _
    $region7: #{tpu_custom_call.1} parent=1 // pred_check_branch
      %40 = sbr.rel (0) target = $region9
    $region8: #{tpu_custom_call.1} parent=1 // pred_region
      %42 = vsyncadd [#allocation6], 0
      %s43 = sshll.u32 %s1, 4
      %s44 = int_to_ptr.hbm [resolvable:$true] %s43
      %s45 = sshll.u32 [#allocation5], 4
      %s46 = int_to_ptr.vmem [resolvable:$true] %s45
      %51 = dma.hbm_to_vmem [thread:$0]  %s44, 512, %s46, [#allocation6], 128, 128, 8
    $region9: #{tpu_custom_call.1} parent=1 // pred_fallthru
      _
    // Predicated region
    $region10: #{tpu_custom_call.1} parent=1 // pred_check
      _
    $region11: #{tpu_custom_call.1} parent=1 // pred_check_branch
      %53 = sbr.rel (0) target = $region13
    $region12: #{tpu_custom_call.1} parent=1 // pred_region
      %55 = vsyncadd [#allocation6], 0
      %s56 = sshll.u32 %s2, 4
      %s57 = int_to_ptr.hbm [resolvable:$true] %s56
      %s58 = sshll.u32 [#allocation7], 4
      %s59 = int_to_ptr.vmem [resolvable:$true] %s58
      %64 = dma.hbm_to_vmem [thread:$0]  %s57, 512, %s59, [#allocation6], 128, 128, 8
    $region13: #{tpu_custom_call.1} parent=1 // pred_fallthru
      _
    // Predicated region
    $region14: #{tpu_custom_call.1} parent=1 // pred_check
      _
    $region15: #{tpu_custom_call.1} parent=1 // pred_check_branch
      %66 = sbr.rel (0) target = $region17
    $region16: #{tpu_custom_call.1} parent=1 // pred_region
      %68 = vsyncadd [#allocation9], 0
      %s69 = sshll.u32 %s3, 4
      %s70 = int_to_ptr.hbm [resolvable:$true] %s69
      %s71 = sshll.u32 [#allocation8], 4
      %s72 = int_to_ptr.vmem [resolvable:$true] %s71
      %77 = dma.hbm_to_vmem [thread:$0]  %s70, 512, %s72, [#allocation9], 128, 128, 8
    $region17: #{tpu_custom_call.1} parent=1 // pred_fallthru
      _
    // Predicated region
    $region18: #{tpu_custom_call.1} parent=1 // pred_check
      _
    $region19: #{tpu_custom_call.1} parent=1 // pred_check_branch
      %79 = sbr.rel (0) target = $region21
    $region20: #{tpu_custom_call.1} parent=1 // pred_region
      %81 = vsyncadd [#allocation9], 0
      %s82 = sshll.u32 %s4, 4
      %s83 = int_to_ptr.hbm [resolvable:$true] %s82
      %s84 = sshll.u32 [#allocation10], 4
      %s85 = int_to_ptr.vmem [resolvable:$true] %s84
      %90 = dma.hbm_to_vmem [thread:$0]  %s83, 6144, %s85, [#allocation9], 128, 128, 8
    $region21: #{tpu_custom_call.1} parent=1 // pred_fallthru
      _
    // Predicated region
    $region22: #{tpu_custom_call.1} parent=1 // pred_check
      _
    $region23: #{tpu_custom_call.1} parent=1 // pred_check_branch
      %92 = sbr.rel (0) target = $region25
    $region24: #{tpu_custom_call.1} parent=1 // pred_region
      _
    $region25: #{tpu_custom_call.1} parent=1 // pred_fallthru
      _
    // Predicated region
    $region26: #{tpu_custom_call.1} parent=1 // pred_check
      _
    $region27: #{tpu_custom_call.1} parent=1 // pred_check_branch
      %94 = sbr.rel (0) target = $region29
    $region28: #{tpu_custom_call.1} parent=1 // pred_region
      _
    $region29: #{tpu_custom_call.1} parent=1 // pred_fallthru
      _
    // Predicated region
    $region30: #{tpu_custom_call.1} parent=1 // pred_check
      _
    $region31: #{tpu_custom_call.1} parent=1 // pred_check_branch
      %96 = sbr.rel (0) target = $region33
    $region32: #{tpu_custom_call.1} parent=1 // pred_region
      %98 = vsyncadd [#allocation12], 0
      %s99 = sshll.u32 %s7, 4
      %s100 = int_to_ptr.hbm [resolvable:$true] %s99
      %s101 = sshll.u32 [#allocation11], 4
      %s102 = int_to_ptr.vmem [resolvable:$true] %s101
      %107 = dma.hbm_to_vmem [thread:$0]  %s100, 2048, %s102, [#allocation12], 128, 128, 8
    $region33: #{tpu_custom_call.1} parent=1 // pred_fallthru
      _
    // Predicated region
    $region34: #{tpu_custom_call.1} parent=1 // pred_check
      _
    $region35: #{tpu_custom_call.1} parent=1 // pred_check_branch
      %109 = sbr.rel (0) target = $region37
    $region36: #{tpu_custom_call.1} parent=1 // pred_region
      _
    $region37: #{tpu_custom_call.1} parent=1 // pred_fallthru
      _
    // Predicated region
    $region38: #{tpu_custom_call.1} parent=1 // pred_check
      _
    $region39: #{tpu_custom_call.1} parent=1 // pred_check_branch
      %111 = sbr.rel (0) target = $region41
    $region40: #{tpu_custom_call.1} parent=1 // pred_region
      _
    $region41: #{tpu_custom_call.1} parent=1 // pred_fallthru
      _
    // Predicated region
    $region42: #{tpu_custom_call.1} parent=1 // pred_check
      _
    $region43: #{tpu_custom_call.1} parent=1 // pred_check_branch
      %113 = sbr.rel (0) target = $region45
    $region44: #{tpu_custom_call.1} parent=1 // pred_region
      %115 = vsyncadd [#allocation12], 0
      %s116 = sshll.u32 %s10, 4
      %s117 = int_to_ptr.hbm [resolvable:$true] %s116
      %s118 = sshll.u32 [#allocation13], 4
      %s119 = int_to_ptr.vmem [resolvable:$true] %s118
      %124 = dma.hbm_to_vmem [thread:$0]  %s117, 6144, %s119, [#allocation12], 128, 128, 8
    $region45: #{tpu_custom_call.1} parent=1 // pred_fallthru
      _
    // Predicated region
    $region46: #{tpu_custom_call.1} parent=1 // pred_check
      _
    $region47: #{tpu_custom_call.1} parent=1 // pred_check_branch
      %126 = sbr.rel (0) target = $region49
    $region48: #{tpu_custom_call.1} parent=1 // pred_region
      _
    $region49: #{tpu_custom_call.1} parent=1 // pred_fallthru
      _
    // Predicated region
    $region50: #{tpu_custom_call.1} parent=1 // pred_check
      _
    $region51: #{tpu_custom_call.1} parent=1 // pred_check_branch
      %128 = sbr.rel (0) target = $region53
    $region52: #{tpu_custom_call.1} parent=1 // pred_region
      _
    $region53: #{tpu_custom_call.1} parent=1 // pred_fallthru
      _
    // Predicated region
    $region54: #{tpu_custom_call.1} parent=1 // pred_check
      _
    $region55: #{tpu_custom_call.1} parent=1 // pred_check_branch
      %130 = sbr.rel (0) target = $region57
    $region56: #{tpu_custom_call.1} parent=1 // pred_region
      %132 = vsyncadd [#allocation15], 0
      %s133 = sshll.u32 %s13, 4
      %s134 = int_to_ptr.hbm [resolvable:$true] %s133
      %s135 = sshll.u32 [#allocation14], 4
      %s136 = int_to_ptr.vmem [resolvable:$true] %s135
      %141 = dma.hbm_to_vmem [thread:$0]  %s134, 2048, %s136, [#allocation15], 128, 128, 8
    $region57: #{tpu_custom_call.1} parent=1 // pred_fallthru
      _
    // Predicated region
    $region58: #{tpu_custom_call.1} parent=1 // pred_check
      _
    $region59: #{tpu_custom_call.1} parent=1 // pred_check_branch
      %143 = sbr.rel (0) target = $region61
    $region60: #{tpu_custom_call.1} parent=1 // pred_region
      %145 = vsyncadd [#allocation15], 0
      %s146 = sshll.u32 %s14, 4
      %s147 = int_to_ptr.hbm [resolvable:$true] %s146
      %s148 = sshll.u32 [#allocation16], 4
      %s149 = int_to_ptr.vmem [resolvable:$true] %s148
      %154 = dma.hbm_to_vmem [thread:$0]  %s147, 2048, %s149, [#allocation15], 128, 128, 8
    $region61: #{tpu_custom_call.1} parent=1 // pred_fallthru
      _
    // Predicated region
    $region62: #{tpu_custom_call.1} parent=1 // pred_check
      _
    $region63: #{tpu_custom_call.1} parent=1 // pred_check_branch
      %156 = sbr.rel (0) target = $region65
    $region64: #{tpu_custom_call.1} parent=1 // pred_region
      %158 = dma.done [#allocation3], 512
    $region65: #{tpu_custom_call.1} parent=1 // pred_fallthru
      _
    // Predicated region
    $region66: #{tpu_custom_call.1} parent=1 // pred_check
      _
    $region67: #{tpu_custom_call.1} parent=1 // pred_check_branch
      %160 = sbr.rel (0) target = $region69
    $region68: #{tpu_custom_call.1} parent=1 // pred_region
      %162 = dma.done [#allocation6], 512
    $region69: #{tpu_custom_call.1} parent=1 // pred_fallthru
      _
    // Predicated region
    $region70: #{tpu_custom_call.1} parent=1 // pred_check
      _
    $region71: #{tpu_custom_call.1} parent=1 // pred_check_branch
      %164 = sbr.rel (0) target = $region73
    $region72: #{tpu_custom_call.1} parent=1 // pred_region
      %166 = dma.done [#allocation6], 512
    $region73: #{tpu_custom_call.1} parent=1 // pred_fallthru
      _
    // Predicated region
    $region74: #{tpu_custom_call.1} parent=1 // pred_check
      _
    $region75: #{tpu_custom_call.1} parent=1 // pred_check_branch
      %168 = sbr.rel (0) target = $region77
    $region76: #{tpu_custom_call.1} parent=1 // pred_region
      %170 = dma.done [#allocation9], 512
    $region77: #{tpu_custom_call.1} parent=1 // pred_fallthru
      _
    // Predicated region
    $region78: #{tpu_custom_call.1} parent=1 // pred_check
      _
    $region79: #{tpu_custom_call.1} parent=1 // pred_check_branch
      %172 = sbr.rel (0) target = $region81
    $region80: #{tpu_custom_call.1} parent=1 // pred_region
      %174 = dma.done [#allocation9], 6144
    $region81: #{tpu_custom_call.1} parent=1 // pred_fallthru
      _
    // Predicated region
    $region82: #{tpu_custom_call.1} parent=1 // pred_check
      _
    $region83: #{tpu_custom_call.1} parent=1 // pred_check_branch
      %176 = sbr.rel (0) target = $region85
    $region84: #{tpu_custom_call.1} parent=1 // pred_region
      %178 = dma.done [#allocation12], 2048
    $region85: #{tpu_custom_call.1} parent=1 // pred_fallthru
      _
    // Predicated region
    $region86: #{tpu_custom_call.1} parent=1 // pred_check
      _
    $region87: #{tpu_custom_call.1} parent=1 // pred_check_branch
      %180 = sbr.rel (0) target = $region89
    $region88: #{tpu_custom_call.1} parent=1 // pred_region
      %182 = dma.done [#allocation12], 6144
    $region89: #{tpu_custom_call.1} parent=1 // pred_fallthru
      _
    // Predicated region
    $region90: #{tpu_custom_call.1} parent=1 // pred_check
      _
    $region91: #{tpu_custom_call.1} parent=1 // pred_check_branch
      %184 = sbr.rel (0) target = $region93
    $region92: #{tpu_custom_call.1} parent=1 // pred_region
      %186 = dma.done [#allocation15], 2048
    $region93: #{tpu_custom_call.1} parent=1 // pred_fallthru
      _
    // Predicated region
    $region94: #{tpu_custom_call.1} parent=1 // pred_check
      _
    $region95: #{tpu_custom_call.1} parent=1 // pred_check_branch
      %188 = sbr.rel (0) target = $region97
    $region96: #{tpu_custom_call.1} parent=1 // pred_region
      %190 = dma.done [#allocation15], 2048
    $region97: #{tpu_custom_call.1} parent=1 // pred_fallthru
      _
    %v191 = vld [vmem:[#allocation2] sm:$0xff]
    %v192 = vld [vmem:[#allocation2 + $0x8] sm:$0xff]
    %v193 = vld [vmem:[#allocation2 + $0x10] sm:$0xff]
    %v194 = vld [vmem:[#allocation2 + $0x18] sm:$0xff]
    %v195 = vld [vmem:[#allocation5] sm:$0xff]
    %v196 = vld [vmem:[#allocation5 + $0x8] sm:$0xff]
    %v197 = vld [vmem:[#allocation5 + $0x10] sm:$0xff]
    %v198 = vld [vmem:[#allocation5 + $0x18] sm:$0xff]
    %v199 = vld [vmem:[#allocation7] sm:$0xff]
    %v200 = vld [vmem:[#allocation7 + $0x8] sm:$0xff]
    %v201 = vld [vmem:[#allocation7 + $0x10] sm:$0xff]
    %v202 = vld [vmem:[#allocation7 + $0x18] sm:$0xff]
    %v203 = vld [vmem:[#allocation16] sm:$0xff]
    %v204 = vld [vmem:[#allocation16 + $0x8] sm:$0xff]
    %v205 = vld [vmem:[#allocation16 + $0x10] sm:$0xff]
    %v206 = vld [vmem:[#allocation16 + $0x18] sm:$0xff]
    %v207 = vld [vmem:[#allocation16 + $0x20] sm:$0xff]
    %v208 = vld [vmem:[#allocation16 + $0x28] sm:$0xff]
    %v209 = vld [vmem:[#allocation16 + $0x30] sm:$0xff]
    %v210 = vld [vmem:[#allocation16 + $0x38] sm:$0xff]
    %v211 = vld [vmem:[#allocation16 + $0x40] sm:$0xff]
    %v212 = vld [vmem:[#allocation16 + $0x48] sm:$0xff]
    %v213 = vld [vmem:[#allocation16 + $0x50] sm:$0xff]
    %v214 = vld [vmem:[#allocation16 + $0x58] sm:$0xff]
    %v215 = vld [vmem:[#allocation16 + $0x60] sm:$0xff]
    %v216 = vld [vmem:[#allocation16 + $0x68] sm:$0xff]
    %v217 = vld [vmem:[#allocation16 + $0x70] sm:$0xff]
    %v218 = vld [vmem:[#allocation16 + $0x78] sm:$0xff]
    %v219 = vmax.f32 %v191, 0.0
    %v220 = vmax.f32 %v192, 0.0
    %v221 = vmax.f32 %v193, 0.0
    %v222 = vmax.f32 %v194, 0.0
    %vm223 = vcmask 261120
    %v225 = vsel %vm223, %v195, 0
    %v228 = vsel %vm223, %v196, 0
    %v231 = vsel %vm223, %v197, 0
    %v234 = vsel %vm223, %v198, 0
    %236 = vmatpush.msra.mxu0 0.0
    %237 = vmatpush.msra.mxu0 0.0
    %238 = vmatpush.msra.mxu0 0.0
    %239 = vmatpush.msra.mxu0 0.0
    %240 = vmatpush.msra.mxu0 0.0
    %241 = vmatpush.msra.mxu0 0.0
    %242 = vmatpush.msra.mxu0 0.0
    %243 = vmatpush.msra.mxu0 0.0
    %244 = vmatpush.msra.mxu0 0.0
    %245 = vmatpush.msra.mxu0 0.0
    %246 = vmatpush.msra.mxu0 0.0
    %247 = vmatpush.msra.mxu0 0.0
    %248 = vmatpush.msra.mxu0 %v222
    %249 = vmatpush.msra.mxu0 %v221
    %250 = vmatpush.msra.mxu0 %v220
    %251 = vmatpush.msra.mxu0 %v219
    %252 = vmatmul.f32.gmra.mxu0 %v225
    %v253 = vpop.f32.mrf.mxu0
    %v254 = vadd.f32 0.0, %v253
    %255 = vmatmul.f32.gmra.mxu0 %v228
    %v256 = vpop.f32.mrf.mxu0
    %v257 = vadd.f32 0.0, %v256
    %258 = vmatmul.f32.gmra.mxu0 %v231
    %v259 = vpop.f32.mrf.mxu0
    %v260 = vadd.f32 0.0, %v259
    %261 = vmatmul.f32.gmra.mxu0 %v234
    %v262 = vpop.f32.mrf.mxu0
    %v263 = vadd.f32 0.0, %v262
    %264 = vdwg.mxu0
    %v266 = vsel %vm223, %v199, 0
    %v269 = vsel %vm223, %v200, 0
    %v272 = vsel %vm223, %v201, 0
    %v275 = vsel %vm223, %v202, 0
    %277 = vmatpush.msra.mxu0 0.0
    %278 = vmatpush.msra.mxu0 0.0
    %279 = vmatpush.msra.mxu0 0.0
    %280 = vmatpush.msra.mxu0 0.0
    %281 = vmatpush.msra.mxu0 0.0
    %282 = vmatpush.msra.mxu0 0.0
    %283 = vmatpush.msra.mxu0 0.0
    %284 = vmatpush.msra.mxu0 0.0
    %285 = vmatpush.msra.mxu0 0.0
    %286 = vmatpush.msra.mxu0 0.0
    %287 = vmatpush.msra.mxu0 0.0
    %288 = vmatpush.msra.mxu0 0.0
    %289 = vmatpush.msra.mxu0 %v222
    %290 = vmatpush.msra.mxu0 %v221
    %291 = vmatpush.msra.mxu0 %v220
    %292 = vmatpush.msra.mxu0 %v219
    %293 = vmatmul.f32.gmra.mxu0 %v266
    %v294 = vpop.f32.mrf.mxu0
    %v295 = vadd.f32 0.0, %v294
    %296 = vmatmul.f32.gmra.mxu0 %v269
    %v297 = vpop.f32.mrf.mxu0
    %v298 = vadd.f32 0.0, %v297
    %299 = vmatmul.f32.gmra.mxu0 %v272
    %v300 = vpop.f32.mrf.mxu0
    %v301 = vadd.f32 0.0, %v300
    %302 = vmatmul.f32.gmra.mxu0 %v275
    %v303 = vpop.f32.mrf.mxu0
    %v304 = vadd.f32 0.0, %v303
    %305 = vdwg.mxu0
    %v306 = vld [vmem:[#allocation10] sm:$0xff]
    %v307 = vld [vmem:[#allocation10 + $0x8] sm:$0xff]
    %v308 = vld [vmem:[#allocation10 + $0x10] sm:$0xff]
    %v309 = vld [vmem:[#allocation10 + $0x18] sm:$0xff]
    %v310 = vld [vmem:[#allocation10 + $0x20] sm:$0xff]
    %v311 = vld [vmem:[#allocation10 + $0x28] sm:$0xff]
    %v312 = vld [vmem:[#allocation10 + $0x30] sm:$0xff]
    %v313 = vld [vmem:[#allocation10 + $0x38] sm:$0xff]
    %v314 = vld [vmem:[#allocation10 + $0x40] sm:$0xff]
    %v315 = vld [vmem:[#allocation10 + $0x48] sm:$0xff]
    %v316 = vld [vmem:[#allocation10 + $0x50] sm:$0xff]
    %v317 = vld [vmem:[#allocation10 + $0x58] sm:$0xff]
    %v318 = vld [vmem:[#allocation10 + $0x60] sm:$0xff]
    %v319 = vld [vmem:[#allocation10 + $0x68] sm:$0xff]
    %v320 = vld [vmem:[#allocation10 + $0x70] sm:$0xff]
    %v321 = vld [vmem:[#allocation10 + $0x78] sm:$0xff]
    %s322 = scalar_lea.vmem [#allocation10], 128
    %v323 = vld [vmem:[%s322] sm:$0xff]
    %v324 = vld [vmem:[%s322 + $0x8] sm:$0xff]
    %v325 = vld [vmem:[%s322 + $0x10] sm:$0xff]
    %v326 = vld [vmem:[%s322 + $0x18] sm:$0xff]
    %v327 = vld [vmem:[%s322 + $0x20] sm:$0xff]
    %v328 = vld [vmem:[%s322 + $0x28] sm:$0xff]
    %v329 = vld [vmem:[%s322 + $0x30] sm:$0xff]
    %v330 = vld [vmem:[%s322 + $0x38] sm:$0xff]
    %v331 = vld [vmem:[%s322 + $0x40] sm:$0xff]
    %v332 = vld [vmem:[%s322 + $0x48] sm:$0xff]
    %v333 = vld [vmem:[%s322 + $0x50] sm:$0xff]
    %v334 = vld [vmem:[%s322 + $0x58] sm:$0xff]
    %v335 = vld [vmem:[%s322 + $0x60] sm:$0xff]
    %v336 = vld [vmem:[%s322 + $0x68] sm:$0xff]
    %v337 = vld [vmem:[%s322 + $0x70] sm:$0xff]
    %v338 = vld [vmem:[%s322 + $0x78] sm:$0xff]
    %339 = vmatpush.msra.mxu0 %v338
    %340 = vmatpush.msra.mxu0 %v337
    %341 = vmatpush.msra.mxu0 %v336
    %342 = vmatpush.msra.mxu0 %v335
    %343 = vmatpush.msra.mxu0 %v334
    %344 = vmatpush.msra.mxu0 %v333
    %345 = vmatpush.msra.mxu0 %v332
    %346 = vmatpush.msra.mxu0 %v331
    %347 = vmatpush.msra.mxu0 %v330
    %348 = vmatpush.msra.mxu0 %v329
    %349 = vmatpush.msra.mxu0 %v328
    %350 = vmatpush.msra.mxu0 %v327
    %351 = vmatpush.msra.mxu0 %v326
    %352 = vmatpush.msra.mxu0 %v325
    %353 = vmatpush.msra.mxu0 %v324
    %354 = vmatpush.msra.mxu0 %v323
    %355 = vmatmul.f32.gmra.mxu0 %v219
    %v356 = vpop.f32.mrf.mxu0
    %v357 = vadd.f32 0.0, %v356
    %358 = vmatmul.f32.gmra.mxu0 %v220
    %v359 = vpop.f32.mrf.mxu0
    %v360 = vadd.f32 0.0, %v359
    %361 = vmatmul.f32.gmra.mxu0 %v221
    %v362 = vpop.f32.mrf.mxu0
    %v363 = vadd.f32 0.0, %v362
    %364 = vmatmul.f32.gmra.mxu0 %v222
    %v365 = vpop.f32.mrf.mxu0
    %v366 = vadd.f32 0.0, %v365
    %367 = vdwg.mxu0
    %368 = vmatpush.msra.mxu0 %v321
    %369 = vmatpush.msra.mxu0 %v320
    %370 = vmatpush.msra.mxu0 %v319
    %371 = vmatpush.msra.mxu0 %v318
    %372 = vmatpush.msra.mxu0 %v317
    %373 = vmatpush.msra.mxu0 %v316
    %374 = vmatpush.msra.mxu0 %v315
    %375 = vmatpush.msra.mxu0 %v314
    %376 = vmatpush.msra.mxu0 %v313
    %377 = vmatpush.msra.mxu0 %v312
    %378 = vmatpush.msra.mxu0 %v311
    %379 = vmatpush.msra.mxu0 %v310
    %380 = vmatpush.msra.mxu0 %v309
    %381 = vmatpush.msra.mxu0 %v308
    %382 = vmatpush.msra.mxu0 %v307
    %383 = vmatpush.msra.mxu0 %v306
    %384 = vmatmul.f32.gmra.mxu0 %v254
    %v385 = vpop.f32.mrf.mxu0
    %v386 = vadd.f32 %v357, %v385
    %387 = vmatmul.f32.gmra.mxu0 %v257
    %v388 = vpop.f32.mrf.mxu0
    %v389 = vadd.f32 %v360, %v388
    %390 = vmatmul.f32.gmra.mxu0 %v260
    %v391 = vpop.f32.mrf.mxu0
    %v392 = vadd.f32 %v363, %v391
    %393 = vmatmul.f32.gmra.mxu0 %v263
    %v394 = vpop.f32.mrf.mxu0
    %v395 = vadd.f32 %v366, %v394
    %396 = vdwg.mxu0
    %s397 = scalar_lea.vmem [#allocation10], 256
    %v398 = vld [vmem:[%s397] sm:$0xff]
    %v399 = vld [vmem:[%s397 + $0x8] sm:$0xff]
    %v400 = vld [vmem:[%s397 + $0x10] sm:$0xff]
    %v401 = vld [vmem:[%s397 + $0x18] sm:$0xff]
    %v402 = vld [vmem:[%s397 + $0x20] sm:$0xff]
    %v403 = vld [vmem:[%s397 + $0x28] sm:$0xff]
    %v404 = vld [vmem:[%s397 + $0x30] sm:$0xff]
    %v405 = vld [vmem:[%s397 + $0x38] sm:$0xff]
    %v406 = vld [vmem:[%s397 + $0x40] sm:$0xff]
    %v407 = vld [vmem:[%s397 + $0x48] sm:$0xff]
    %v408 = vld [vmem:[%s397 + $0x50] sm:$0xff]
    %v409 = vld [vmem:[%s397 + $0x58] sm:$0xff]
    %v410 = vld [vmem:[%s397 + $0x60] sm:$0xff]
    %v411 = vld [vmem:[%s397 + $0x68] sm:$0xff]
    %v412 = vld [vmem:[%s397 + $0x70] sm:$0xff]
    %v413 = vld [vmem:[%s397 + $0x78] sm:$0xff]
    %414 = vmatpush.msra.mxu0 %v413
    %415 = vmatpush.msra.mxu0 %v412
    %416 = vmatpush.msra.mxu0 %v411
    %417 = vmatpush.msra.mxu0 %v410
    %418 = vmatpush.msra.mxu0 %v409
    %419 = vmatpush.msra.mxu0 %v408
    %420 = vmatpush.msra.mxu0 %v407
    %421 = vmatpush.msra.mxu0 %v406
    %422 = vmatpush.msra.mxu0 %v405
    %423 = vmatpush.msra.mxu0 %v404
    %424 = vmatpush.msra.mxu0 %v403
    %425 = vmatpush.msra.mxu0 %v402
    %426 = vmatpush.msra.mxu0 %v401
    %427 = vmatpush.msra.mxu0 %v400
    %428 = vmatpush.msra.mxu0 %v399
    %429 = vmatpush.msra.mxu0 %v398
    %430 = vmatmul.f32.gmra.mxu0 %v295
    %v431 = vpop.f32.mrf.mxu0
    %v432 = vadd.f32 0.0, %v431
    %433 = vmatmul.f32.gmra.mxu0 %v298
    %v434 = vpop.f32.mrf.mxu0
    %v435 = vadd.f32 0.0, %v434
    %436 = vmatmul.f32.gmra.mxu0 %v301
    %v437 = vpop.f32.mrf.mxu0
    %v438 = vadd.f32 0.0, %v437
    %439 = vmatmul.f32.gmra.mxu0 %v304
    %v440 = vpop.f32.mrf.mxu0
    %v441 = vadd.f32 0.0, %v440
    %442 = vdwg.mxu0
    %v443 = vadd.f32 %v386, %v432
    %v444 = vadd.f32 %v389, %v435
    %v445 = vadd.f32 %v392, %v438
    %v446 = vadd.f32 %v395, %v441
    %447 = vmatpush.msra.mxu0 %v218
    %448 = vmatpush.msra.mxu0 %v217
    %449 = vmatpush.msra.mxu0 %v216
    %450 = vmatpush.msra.mxu0 %v215
    %451 = vmatpush.msra.mxu0 %v214
    %452 = vmatpush.msra.mxu0 %v213
    %453 = vmatpush.msra.mxu0 %v212
    %454 = vmatpush.msra.mxu0 %v211
    %455 = vmatpush.msra.mxu0 %v210
    %456 = vmatpush.msra.mxu0 %v209
    %457 = vmatpush.msra.mxu0 %v208
    %458 = vmatpush.msra.mxu0 %v207
    %459 = vmatpush.msra.mxu0 %v206
    %460 = vmatpush.msra.mxu0 %v205
    %461 = vmatpush.msra.mxu0 %v204
    %462 = vmatpush.msra.mxu0 %v203
    %463 = vmatmul.f32.gmra.mxu0 %v443
    %v464 = vpop.f32.mrf.mxu0
    %v465 = vadd.f32 0.0, %v464
    %466 = vmatmul.f32.gmra.mxu0 %v444
    %v467 = vpop.f32.mrf.mxu0
    %v468 = vadd.f32 0.0, %v467
    %469 = vmatmul.f32.gmra.mxu0 %v445
    %v470 = vpop.f32.mrf.mxu0
    %v471 = vadd.f32 0.0, %v470
    %472 = vmatmul.f32.gmra.mxu0 %v446
    %v473 = vpop.f32.mrf.mxu0
    %v474 = vadd.f32 0.0, %v473
    %475 = vdwg.mxu0
    %v476 = vadd.f32 %v465, %v468
    %v477 = vadd.f32 %v476, %v471
    %v478 = vadd.f32 %v477, %v474
    %v479 = vrot.slane %v478, 4
    %v480 = vadd.f32 %v478, %v479
    %v481 = vrot.slane %v480, 2
    %v482 = vadd.f32 %v480, %v481
    %v483 = vrot.slane %v482, 1
    %v484 = vadd.f32 %v482, %v483
    %v485 = vmul.f32 %v484, 0.001953125
    %v486 = vsub.f32 %v443, %v485
    %v487 = vsub.f32 %v444, %v485
    %v488 = vsub.f32 %v445, %v485
    %v489 = vsub.f32 %v446, %v485
    %v490 = vmul.f32 %v486, %v486
    %v491 = vmul.f32 %v487, %v487
    %v492 = vmul.f32 %v488, %v488
    %v493 = vmul.f32 %v489, %v489
    %494 = vmatpush.msra.mxu0 %v218
    %495 = vmatpush.msra.mxu0 %v217
    %496 = vmatpush.msra.mxu0 %v216
    %497 = vmatpush.msra.mxu0 %v215
    %498 = vmatpush.msra.mxu0 %v214
    %499 = vmatpush.msra.mxu0 %v213
    %500 = vmatpush.msra.mxu0 %v212
    %501 = vmatpush.msra.mxu0 %v211
    %502 = vmatpush.msra.mxu0 %v210
    %503 = vmatpush.msra.mxu0 %v209
    %504 = vmatpush.msra.mxu0 %v208
    %505 = vmatpush.msra.mxu0 %v207
    %506 = vmatpush.msra.mxu0 %v206
    %507 = vmatpush.msra.mxu0 %v205
    %508 = vmatpush.msra.mxu0 %v204
    %509 = vmatpush.msra.mxu0 %v203
    %510 = vmatmul.f32.gmra.mxu0 %v490
    %v511 = vpop.f32.mrf.mxu0
    %v512 = vadd.f32 0.0, %v511
    %513 = vmatmul.f32.gmra.mxu0 %v491
    %v514 = vpop.f32.mrf.mxu0
    %v515 = vadd.f32 0.0, %v514
    %516 = vmatmul.f32.gmra.mxu0 %v492
    %v517 = vpop.f32.mrf.mxu0
    %v518 = vadd.f32 0.0, %v517
    %519 = vmatmul.f32.gmra.mxu0 %v493
    %v520 = vpop.f32.mrf.mxu0
    %v521 = vadd.f32 0.0, %v520
    %522 = vdwg.mxu0
    %v523 = vadd.f32 %v512, %v515
    %v524 = vadd.f32 %v523, %v518
    %v525 = vadd.f32 %v524, %v521
    %v526 = vrot.slane %v525, 4
    %v527 = vadd.f32 %v525, %v526
    %v528 = vrot.slane %v527, 2
    %v529 = vadd.f32 %v527, %v528
    %v530 = vrot.slane %v529, 1
    %v531 = vadd.f32 %v529, %v530
    %v532 = vmul.f32 %v531, 0.001953125
    %v533 = vadd.f32 %v532, 1e-05
    %v534 = vrsqrt.pop %v533
    %v535 = vmul.f32 %v534, %v533
    %v536 = vmul.f32 %v535, %v534
    %v537 = vmul.f32 0.5, %v536
    %v538 = vsub.f32 1.5, %v537
    %v539 = vmul.f32 %v534, %v538
    %vm540 = vweird.f32 %v533
    %vm541 = vweird.f32 %v534
    %vm542 = vmor %vm540, %vm541
    %v543 = vsel %vm542, %v534, %v539
    %v544 = vmul.f32 %v486, %v543
    %v545 = vmul.f32 %v487, %v543
    %v546 = vmul.f32 %v488, %v543
    %v547 = vmul.f32 %v489, %v543
    %v548 = vld [vmem:[%s5] sm:$0x1]
    %v550 = vperm.slane %v548, 0
    %v552 = vmul.f32 %v544, %v550
    %v553 = vmul.f32 %v545, %v550
    %v554 = vmul.f32 %v546, %v550
    %v555 = vmul.f32 %v547, %v550
    %v556 = vld [vmem:[%s6] sm:$0x1]
    %v558 = vperm.slane %v556, 0
    %v560 = vadd.f32 %v552, %v558
    %v561 = vadd.f32 %v553, %v558
    %v562 = vadd.f32 %v554, %v558
    %v563 = vadd.f32 %v555, %v558
    %v564 = vld [vmem:[#allocation11] sm:$0xff]
    %v565 = vld [vmem:[#allocation11 + $0x8] sm:$0xff]
    %v566 = vld [vmem:[#allocation11 + $0x10] sm:$0xff]
    %v567 = vld [vmem:[#allocation11 + $0x18] sm:$0xff]
    %v568 = vld [vmem:[#allocation11 + $0x20] sm:$0xff]
    %v569 = vld [vmem:[#allocation11 + $0x28] sm:$0xff]
    %v570 = vld [vmem:[#allocation11 + $0x30] sm:$0xff]
    %v571 = vld [vmem:[#allocation11 + $0x38] sm:$0xff]
    %v572 = vld [vmem:[#allocation11 + $0x40] sm:$0xff]
    %v573 = vld [vmem:[#allocation11 + $0x48] sm:$0xff]
    %v574 = vld [vmem:[#allocation11 + $0x50] sm:$0xff]
    %v575 = vld [vmem:[#allocation11 + $0x58] sm:$0xff]
    %v576 = vld [vmem:[#allocation11 + $0x60] sm:$0xff]
    %v577 = vld [vmem:[#allocation11 + $0x68] sm:$0xff]
    %v578 = vld [vmem:[#allocation11 + $0x70] sm:$0xff]
    %v579 = vld [vmem:[#allocation11 + $0x78] sm:$0xff]
    %580 = vmatpush.msra.mxu0 %v579
    %581 = vmatpush.msra.mxu0 %v578
    %582 = vmatpush.msra.mxu0 %v577
    %583 = vmatpush.msra.mxu0 %v576
    %584 = vmatpush.msra.mxu0 %v575
    %585 = vmatpush.msra.mxu0 %v574
    %586 = vmatpush.msra.mxu0 %v573
    %587 = vmatpush.msra.mxu0 %v572
    %588 = vmatpush.msra.mxu0 %v571
    %589 = vmatpush.msra.mxu0 %v570
    %590 = vmatpush.msra.mxu0 %v569
    %591 = vmatpush.msra.mxu0 %v568
    %592 = vmatpush.msra.mxu0 %v567
    %593 = vmatpush.msra.mxu0 %v566
    %594 = vmatpush.msra.mxu0 %v565
    %595 = vmatpush.msra.mxu0 %v564
    %596 = vmatmul.f32.gmra.mxu0 %v219
    %v597 = vpop.f32.mrf.mxu0
    %v598 = vadd.f32 0.0, %v597
    %599 = vmatmul.f32.gmra.mxu0 %v220
    %v600 = vpop.f32.mrf.mxu0
    %v601 = vadd.f32 0.0, %v600
    %602 = vmatmul.f32.gmra.mxu0 %v221
    %v603 = vpop.f32.mrf.mxu0
    %v604 = vadd.f32 0.0, %v603
    %605 = vmatmul.f32.gmra.mxu0 %v222
    %v606 = vpop.f32.mrf.mxu0
    %v607 = vadd.f32 0.0, %v606
    %608 = vdwg.mxu0
    %609 = vmatpush.msra.mxu0 %v218
    %610 = vmatpush.msra.mxu0 %v217
    %611 = vmatpush.msra.mxu0 %v216
    %612 = vmatpush.msra.mxu0 %v215
    %613 = vmatpush.msra.mxu0 %v214
    %614 = vmatpush.msra.mxu0 %v213
    %615 = vmatpush.msra.mxu0 %v212
    %616 = vmatpush.msra.mxu0 %v211
    %617 = vmatpush.msra.mxu0 %v210
    %618 = vmatpush.msra.mxu0 %v209
    %619 = vmatpush.msra.mxu0 %v208
    %620 = vmatpush.msra.mxu0 %v207
    %621 = vmatpush.msra.mxu0 %v206
    %622 = vmatpush.msra.mxu0 %v205
    %623 = vmatpush.msra.mxu0 %v204
    %624 = vmatpush.msra.mxu0 %v203
    %625 = vmatmul.f32.gmra.mxu0 %v598
    %v626 = vpop.f32.mrf.mxu0
    %v627 = vadd.f32 0.0, %v626
    %628 = vmatmul.f32.gmra.mxu0 %v601
    %v629 = vpop.f32.mrf.mxu0
    %v630 = vadd.f32 0.0, %v629
    %631 = vmatmul.f32.gmra.mxu0 %v604
    %v632 = vpop.f32.mrf.mxu0
    %v633 = vadd.f32 0.0, %v632
    %634 = vmatmul.f32.gmra.mxu0 %v607
    %v635 = vpop.f32.mrf.mxu0
    %v636 = vadd.f32 0.0, %v635
    %637 = vdwg.mxu0
    %v638 = vadd.f32 %v627, %v630
    %v639 = vadd.f32 %v638, %v633
    %v640 = vadd.f32 %v639, %v636
    %v641 = vrot.slane %v640, 4
    %v642 = vadd.f32 %v640, %v641
    %v643 = vrot.slane %v642, 2
    %v644 = vadd.f32 %v642, %v643
    %v645 = vrot.slane %v644, 1
    %v646 = vadd.f32 %v644, %v645
    %v647 = vmul.f32 %v646, 0.001953125
    %v648 = vsub.f32 %v598, %v647
    %v649 = vsub.f32 %v601, %v647
    %v650 = vsub.f32 %v604, %v647
    %v651 = vsub.f32 %v607, %v647
    %v652 = vmul.f32 %v648, %v648
    %v653 = vmul.f32 %v649, %v649
    %v654 = vmul.f32 %v650, %v650
    %v655 = vmul.f32 %v651, %v651
    %656 = vmatpush.msra.mxu0 %v218
    %657 = vmatpush.msra.mxu0 %v217
    %658 = vmatpush.msra.mxu0 %v216
    %659 = vmatpush.msra.mxu0 %v215
    %660 = vmatpush.msra.mxu0 %v214
    %661 = vmatpush.msra.mxu0 %v213
    %662 = vmatpush.msra.mxu0 %v212
    %663 = vmatpush.msra.mxu0 %v211
    %664 = vmatpush.msra.mxu0 %v210
    %665 = vmatpush.msra.mxu0 %v209
    %666 = vmatpush.msra.mxu0 %v208
    %667 = vmatpush.msra.mxu0 %v207
    %668 = vmatpush.msra.mxu0 %v206
    %669 = vmatpush.msra.mxu0 %v205
    %670 = vmatpush.msra.mxu0 %v204
    %671 = vmatpush.msra.mxu0 %v203
    %672 = vmatmul.f32.gmra.mxu0 %v652
    %v673 = vpop.f32.mrf.mxu0
    %v674 = vadd.f32 0.0, %v673
    %675 = vmatmul.f32.gmra.mxu0 %v653
    %v676 = vpop.f32.mrf.mxu0
    %v677 = vadd.f32 0.0, %v676
    %678 = vmatmul.f32.gmra.mxu0 %v654
    %v679 = vpop.f32.mrf.mxu0
    %v680 = vadd.f32 0.0, %v679
    %681 = vmatmul.f32.gmra.mxu0 %v655
    %v682 = vpop.f32.mrf.mxu0
    %v683 = vadd.f32 0.0, %v682
    %684 = vdwg.mxu0
    %v685 = vadd.f32 %v674, %v677
    %v686 = vadd.f32 %v685, %v680
    %v687 = vadd.f32 %v686, %v683
    %v688 = vrot.slane %v687, 4
    %v689 = vadd.f32 %v687, %v688
    %v690 = vrot.slane %v689, 2
    %v691 = vadd.f32 %v689, %v690
    %v692 = vrot.slane %v691, 1
    %v693 = vadd.f32 %v691, %v692
    %v694 = vmul.f32 %v693, 0.001953125
    %v695 = vadd.f32 %v694, 1e-05
    %v696 = vrsqrt.pop %v695
    %v697 = vmul.f32 %v696, %v695
    %v698 = vmul.f32 %v697, %v696
    %v699 = vmul.f32 0.5, %v698
    %v700 = vsub.f32 1.5, %v699
    %v701 = vmul.f32 %v696, %v700
    %vm702 = vweird.f32 %v695
    %vm703 = vweird.f32 %v696
    %vm704 = vmor %vm702, %vm703
    %v705 = vsel %vm704, %v696, %v701
    %v706 = vmul.f32 %v648, %v705
    %v707 = vmul.f32 %v649, %v705
    %v708 = vmul.f32 %v650, %v705
    %v709 = vmul.f32 %v651, %v705
    %v710 = vld [vmem:[%s8] sm:$0x1]
    %v712 = vperm.slane %v710, 0
    %v714 = vmul.f32 %v706, %v712
    %v715 = vmul.f32 %v707, %v712
    %v716 = vmul.f32 %v708, %v712
    %v717 = vmul.f32 %v709, %v712
    %v718 = vld [vmem:[%s9] sm:$0x1]
    %v720 = vperm.slane %v718, 0
    %v722 = vadd.f32 %v714, %v720
    %v723 = vadd.f32 %v715, %v720
    %v724 = vadd.f32 %v716, %v720
    %v725 = vadd.f32 %v717, %v720
    %v726 = vadd.f32 %v722, %v560
    %v727 = vadd.f32 %v723, %v561
    %v728 = vadd.f32 %v724, %v562
    %v729 = vadd.f32 %v725, %v563
    %v730 = vld [vmem:[#allocation8] sm:$0xff]
    %v731 = vld [vmem:[#allocation8 + $0x8] sm:$0xff]
    %v732 = vld [vmem:[#allocation8 + $0x10] sm:$0xff]
    %v733 = vld [vmem:[#allocation8 + $0x18] sm:$0xff]
    %v735 = vsel %vm223, %v730, 0
    %v738 = vsel %vm223, %v731, 0
    %v741 = vsel %vm223, %v732, 0
    %v744 = vsel %vm223, %v733, 0
    %746 = vmatpush.msra.mxu0 0.0
    %747 = vmatpush.msra.mxu0 0.0
    %748 = vmatpush.msra.mxu0 0.0
    %749 = vmatpush.msra.mxu0 0.0
    %750 = vmatpush.msra.mxu0 0.0
    %751 = vmatpush.msra.mxu0 0.0
    %752 = vmatpush.msra.mxu0 0.0
    %753 = vmatpush.msra.mxu0 0.0
    %754 = vmatpush.msra.mxu0 0.0
    %755 = vmatpush.msra.mxu0 0.0
    %756 = vmatpush.msra.mxu0 0.0
    %757 = vmatpush.msra.mxu0 0.0
    %758 = vmatpush.msra.mxu0 %v194
    %759 = vmatpush.msra.mxu0 %v193
    %760 = vmatpush.msra.mxu0 %v192
    %761 = vmatpush.msra.mxu0 %v191
    %762 = vmatmul.f32.gmra.mxu0 %v735
    %v763 = vpop.f32.mrf.mxu0
    %v764 = vadd.f32 0.0, %v763
    %765 = vmatmul.f32.gmra.mxu0 %v738
    %v766 = vpop.f32.mrf.mxu0
    %v767 = vadd.f32 0.0, %v766
    %768 = vmatmul.f32.gmra.mxu0 %v741
    %v769 = vpop.f32.mrf.mxu0
    %v770 = vadd.f32 0.0, %v769
    %771 = vmatmul.f32.gmra.mxu0 %v744
    %v772 = vpop.f32.mrf.mxu0
    %v773 = vadd.f32 0.0, %v772
    %774 = vdwg.mxu0
    %v775 = vld [vmem:[#allocation14] sm:$0xff]
    %v776 = vld [vmem:[#allocation14 + $0x8] sm:$0xff]
    %v777 = vld [vmem:[#allocation14 + $0x10] sm:$0xff]
    %v778 = vld [vmem:[#allocation14 + $0x18] sm:$0xff]
    %v779 = vld [vmem:[#allocation14 + $0x20] sm:$0xff]
    %v780 = vld [vmem:[#allocation14 + $0x28] sm:$0xff]
    %v781 = vld [vmem:[#allocation14 + $0x30] sm:$0xff]
    %v782 = vld [vmem:[#allocation14 + $0x38] sm:$0xff]
    %v783 = vld [vmem:[#allocation14 + $0x40] sm:$0xff]
    %v784 = vld [vmem:[#allocation14 + $0x48] sm:$0xff]
    %v785 = vld [vmem:[#allocation14 + $0x50] sm:$0xff]
    %v786 = vld [vmem:[#allocation14 + $0x58] sm:$0xff]
    %v787 = vld [vmem:[#allocation14 + $0x60] sm:$0xff]
    %v788 = vld [vmem:[#allocation14 + $0x68] sm:$0xff]
    %v789 = vld [vmem:[#allocation14 + $0x70] sm:$0xff]
    %v790 = vld [vmem:[#allocation14 + $0x78] sm:$0xff]
    %v791 = vmax.f32 %v560, 0.0
    %v792 = vmax.f32 %v561, 0.0
    %v793 = vmax.f32 %v562, 0.0
    %v794 = vmax.f32 %v563, 0.0
    %795 = vmatpush.msra.mxu0 0.0
    %796 = vmatpush.msra.mxu0 0.0
    %797 = vmatpush.msra.mxu0 0.0
    %798 = vmatpush.msra.mxu0 0.0
    %799 = vmatpush.msra.mxu0 0.0
    %800 = vmatpush.msra.mxu0 0.0
    %801 = vmatpush.msra.mxu0 0.0
    %802 = vmatpush.msra.mxu0 0.0
    %803 = vmatpush.msra.mxu0 0.0
    %804 = vmatpush.msra.mxu0 0.0
    %805 = vmatpush.msra.mxu0 0.0
    %806 = vmatpush.msra.mxu0 0.0
    %807 = vmatpush.msra.mxu0 %v794
    %808 = vmatpush.msra.mxu0 %v793
    %809 = vmatpush.msra.mxu0 %v792
    %810 = vmatpush.msra.mxu0 %v791
    %811 = vmatmul.f32.gmra.mxu0 %v225
    %v812 = vpop.f32.mrf.mxu0
    %v813 = vadd.f32 0.0, %v812
    %814 = vmatmul.f32.gmra.mxu0 %v228
    %v815 = vpop.f32.mrf.mxu0
    %v816 = vadd.f32 0.0, %v815
    %817 = vmatmul.f32.gmra.mxu0 %v231
    %v818 = vpop.f32.mrf.mxu0
    %v819 = vadd.f32 0.0, %v818
    %820 = vmatmul.f32.gmra.mxu0 %v234
    %v821 = vpop.f32.mrf.mxu0
    %v822 = vadd.f32 0.0, %v821
    %823 = vdwg.mxu0
    %824 = vmatpush.msra.mxu0 0.0
    %825 = vmatpush.msra.mxu0 0.0
    %826 = vmatpush.msra.mxu0 0.0
    %827 = vmatpush.msra.mxu0 0.0
    %828 = vmatpush.msra.mxu0 0.0
    %829 = vmatpush.msra.mxu0 0.0
    %830 = vmatpush.msra.mxu0 0.0
    %831 = vmatpush.msra.mxu0 0.0
    %832 = vmatpush.msra.mxu0 0.0
    %833 = vmatpush.msra.mxu0 0.0
    %834 = vmatpush.msra.mxu0 0.0
    %835 = vmatpush.msra.mxu0 0.0
    %836 = vmatpush.msra.mxu0 %v794
    %837 = vmatpush.msra.mxu0 %v793
    %838 = vmatpush.msra.mxu0 %v792
    %839 = vmatpush.msra.mxu0 %v791
    %840 = vmatmul.f32.gmra.mxu0 %v266
    %v841 = vpop.f32.mrf.mxu0
    %v842 = vadd.f32 0.0, %v841
    %843 = vmatmul.f32.gmra.mxu0 %v269
    %v844 = vpop.f32.mrf.mxu0
    %v845 = vadd.f32 0.0, %v844
    %846 = vmatmul.f32.gmra.mxu0 %v272
    %v847 = vpop.f32.mrf.mxu0
    %v848 = vadd.f32 0.0, %v847
    %849 = vmatmul.f32.gmra.mxu0 %v275
    %v850 = vpop.f32.mrf.mxu0
    %v851 = vadd.f32 0.0, %v850
    %852 = vdwg.mxu0
    %v853 = vld [vmem:[#allocation13] sm:$0xff]
    %v854 = vld [vmem:[#allocation13 + $0x8] sm:$0xff]
    %v855 = vld [vmem:[#allocation13 + $0x10] sm:$0xff]
    %v856 = vld [vmem:[#allocation13 + $0x18] sm:$0xff]
    %v857 = vld [vmem:[#allocation13 + $0x20] sm:$0xff]
    %v858 = vld [vmem:[#allocation13 + $0x28] sm:$0xff]
    %v859 = vld [vmem:[#allocation13 + $0x30] sm:$0xff]
    %v860 = vld [vmem:[#allocation13 + $0x38] sm:$0xff]
    %v861 = vld [vmem:[#allocation13 + $0x40] sm:$0xff]
    %v862 = vld [vmem:[#allocation13 + $0x48] sm:$0xff]
    %v863 = vld [vmem:[#allocation13 + $0x50] sm:$0xff]
    %v864 = vld [vmem:[#allocation13 + $0x58] sm:$0xff]
    %v865 = vld [vmem:[#allocation13 + $0x60] sm:$0xff]
    %v866 = vld [vmem:[#allocation13 + $0x68] sm:$0xff]
    %v867 = vld [vmem:[#allocation13 + $0x70] sm:$0xff]
    %v868 = vld [vmem:[#allocation13 + $0x78] sm:$0xff]
    %s869 = scalar_lea.vmem [#allocation13], 128
    %v870 = vld [vmem:[%s869] sm:$0xff]
    %v871 = vld [vmem:[%s869 + $0x8] sm:$0xff]
    %v872 = vld [vmem:[%s869 + $0x10] sm:$0xff]
    %v873 = vld [vmem:[%s869 + $0x18] sm:$0xff]
    %v874 = vld [vmem:[%s869 + $0x20] sm:$0xff]
    %v875 = vld [vmem:[%s869 + $0x28] sm:$0xff]
    %v876 = vld [vmem:[%s869 + $0x30] sm:$0xff]
    %v877 = vld [vmem:[%s869 + $0x38] sm:$0xff]
    %v878 = vld [vmem:[%s869 + $0x40] sm:$0xff]
    %v879 = vld [vmem:[%s869 + $0x48] sm:$0xff]
    %v880 = vld [vmem:[%s869 + $0x50] sm:$0xff]
    %v881 = vld [vmem:[%s869 + $0x58] sm:$0xff]
    %v882 = vld [vmem:[%s869 + $0x60] sm:$0xff]
    %v883 = vld [vmem:[%s869 + $0x68] sm:$0xff]
    %v884 = vld [vmem:[%s869 + $0x70] sm:$0xff]
    %v885 = vld [vmem:[%s869 + $0x78] sm:$0xff]
    %886 = vmatpush.msra.mxu0 %v885
    %887 = vmatpush.msra.mxu0 %v884
    %888 = vmatpush.msra.mxu0 %v883
    %889 = vmatpush.msra.mxu0 %v882
    %890 = vmatpush.msra.mxu0 %v881
    %891 = vmatpush.msra.mxu0 %v880
    %892 = vmatpush.msra.mxu0 %v879
    %893 = vmatpush.msra.mxu0 %v878
    %894 = vmatpush.msra.mxu0 %v877
    %895 = vmatpush.msra.mxu0 %v876
    %896 = vmatpush.msra.mxu0 %v875
    %897 = vmatpush.msra.mxu0 %v874
    %898 = vmatpush.msra.mxu0 %v873
    %899 = vmatpush.msra.mxu0 %v872
    %900 = vmatpush.msra.mxu0 %v871
    %901 = vmatpush.msra.mxu0 %v870
    %902 = vmatmul.f32.gmra.mxu0 %v791
    %v903 = vpop.f32.mrf.mxu0
    %v904 = vadd.f32 0.0, %v903
    %905 = vmatmul.f32.gmra.mxu0 %v792
    %v906 = vpop.f32.mrf.mxu0
    %v907 = vadd.f32 0.0, %v906
    %908 = vmatmul.f32.gmra.mxu0 %v793
    %v909 = vpop.f32.mrf.mxu0
    %v910 = vadd.f32 0.0, %v909
    %911 = vmatmul.f32.gmra.mxu0 %v794
    %v912 = vpop.f32.mrf.mxu0
    %v913 = vadd.f32 0.0, %v912
    %914 = vdwg.mxu0
    %915 = vmatpush.msra.mxu0 %v868
    %916 = vmatpush.msra.mxu0 %v867
    %917 = vmatpush.msra.mxu0 %v866
    %918 = vmatpush.msra.mxu0 %v865
    %919 = vmatpush.msra.mxu0 %v864
    %920 = vmatpush.msra.mxu0 %v863
    %921 = vmatpush.msra.mxu0 %v862
    %922 = vmatpush.msra.mxu0 %v861
    %923 = vmatpush.msra.mxu0 %v860
    %924 = vmatpush.msra.mxu0 %v859
    %925 = vmatpush.msra.mxu0 %v858
    %926 = vmatpush.msra.mxu0 %v857
    %927 = vmatpush.msra.mxu0 %v856
    %928 = vmatpush.msra.mxu0 %v855
    %929 = vmatpush.msra.mxu0 %v854
    %930 = vmatpush.msra.mxu0 %v853
    %931 = vmatmul.f32.gmra.mxu0 %v813
    %v932 = vpop.f32.mrf.mxu0
    %v933 = vadd.f32 %v904, %v932
    %934 = vmatmul.f32.gmra.mxu0 %v816
    %v935 = vpop.f32.mrf.mxu0
    %v936 = vadd.f32 %v907, %v935
    %937 = vmatmul.f32.gmra.mxu0 %v819
    %v938 = vpop.f32.mrf.mxu0
    %v939 = vadd.f32 %v910, %v938
    %940 = vmatmul.f32.gmra.mxu0 %v822
    %v941 = vpop.f32.mrf.mxu0
    %v942 = vadd.f32 %v913, %v941
    %943 = vdwg.mxu0
    %s944 = scalar_lea.vmem [#allocation13], 256
    %v945 = vld [vmem:[%s944] sm:$0xff]
    %v946 = vld [vmem:[%s944 + $0x8] sm:$0xff]
    %v947 = vld [vmem:[%s944 + $0x10] sm:$0xff]
    %v948 = vld [vmem:[%s944 + $0x18] sm:$0xff]
    %v949 = vld [vmem:[%s944 + $0x20] sm:$0xff]
    %v950 = vld [vmem:[%s944 + $0x28] sm:$0xff]
    %v951 = vld [vmem:[%s944 + $0x30] sm:$0xff]
    %v952 = vld [vmem:[%s944 + $0x38] sm:$0xff]
    %v953 = vld [vmem:[%s944 + $0x40] sm:$0xff]
    %v954 = vld [vmem:[%s944 + $0x48] sm:$0xff]
    %v955 = vld [vmem:[%s944 + $0x50] sm:$0xff]
    %v956 = vld [vmem:[%s944 + $0x58] sm:$0xff]
    %v957 = vld [vmem:[%s944 + $0x60] sm:$0xff]
    %v958 = vld [vmem:[%s944 + $0x68] sm:$0xff]
    %v959 = vld [vmem:[%s944 + $0x70] sm:$0xff]
    %v960 = vld [vmem:[%s944 + $0x78] sm:$0xff]
    %961 = vmatpush.msra.mxu0 %v960
    %962 = vmatpush.msra.mxu0 %v959
    %963 = vmatpush.msra.mxu0 %v958
    %964 = vmatpush.msra.mxu0 %v957
    %965 = vmatpush.msra.mxu0 %v956
    %966 = vmatpush.msra.mxu0 %v955
    %967 = vmatpush.msra.mxu0 %v954
    %968 = vmatpush.msra.mxu0 %v953
    %969 = vmatpush.msra.mxu0 %v952
    %970 = vmatpush.msra.mxu0 %v951
    %971 = vmatpush.msra.mxu0 %v950
    %972 = vmatpush.msra.mxu0 %v949
    %973 = vmatpush.msra.mxu0 %v948
    %974 = vmatpush.msra.mxu0 %v947
    %975 = vmatpush.msra.mxu0 %v946
    %976 = vmatpush.msra.mxu0 %v945
    %977 = vmatmul.f32.gmra.mxu0 %v842
    %v978 = vpop.f32.mrf.mxu0
    %v979 = vadd.f32 0.0, %v978
    %980 = vmatmul.f32.gmra.mxu0 %v845
    %v981 = vpop.f32.mrf.mxu0
    %v982 = vadd.f32 0.0, %v981
    %983 = vmatmul.f32.gmra.mxu0 %v848
    %v984 = vpop.f32.mrf.mxu0
    %v985 = vadd.f32 0.0, %v984
    %986 = vmatmul.f32.gmra.mxu0 %v851
    %v987 = vpop.f32.mrf.mxu0
    %v988 = vadd.f32 0.0, %v987
    %989 = vdwg.mxu0
    %v990 = vadd.f32 %v933, %v979
    %v991 = vadd.f32 %v936, %v982
    %v992 = vadd.f32 %v939, %v985
    %v993 = vadd.f32 %v942, %v988
    %994 = vmatpush.msra.mxu0 %v218
    %995 = vmatpush.msra.mxu0 %v217
    %996 = vmatpush.msra.mxu0 %v216
    %997 = vmatpush.msra.mxu0 %v215
    %998 = vmatpush.msra.mxu0 %v214
    %999 = vmatpush.msra.mxu0 %v213
    %1000 = vmatpush.msra.mxu0 %v212
    %1001 = vmatpush.msra.mxu0 %v211
    %1002 = vmatpush.msra.mxu0 %v210
    %1003 = vmatpush.msra.mxu0 %v209
    %1004 = vmatpush.msra.mxu0 %v208
    %1005 = vmatpush.msra.mxu0 %v207
    %1006 = vmatpush.msra.mxu0 %v206
    %1007 = vmatpush.msra.mxu0 %v205
    %1008 = vmatpush.msra.mxu0 %v204
    %1009 = vmatpush.msra.mxu0 %v203
    %1010 = vmatmul.f32.gmra.mxu0 %v990
    %v1011 = vpop.f32.mrf.mxu0
    %v1012 = vadd.f32 0.0, %v1011
    %1013 = vmatmul.f32.gmra.mxu0 %v991
    %v1014 = vpop.f32.mrf.mxu0
    %v1015 = vadd.f32 0.0, %v1014
    %1016 = vmatmul.f32.gmra.mxu0 %v992
    %v1017 = vpop.f32.mrf.mxu0
    %v1018 = vadd.f32 0.0, %v1017
    %1019 = vmatmul.f32.gmra.mxu0 %v993
    %v1020 = vpop.f32.mrf.mxu0
    %v1021 = vadd.f32 0.0, %v1020
    %1022 = vdwg.mxu0
    %v1023 = vadd.f32 %v1012, %v1015
    %v1024 = vadd.f32 %v1023, %v1018
    %v1025 = vadd.f32 %v1024, %v1021
    %v1026 = vrot.slane %v1025, 4
    %v1027 = vadd.f32 %v1025, %v1026
    %v1028 = vrot.slane %v1027, 2
    %v1029 = vadd.f32 %v1027, %v1028
    %v1030 = vrot.slane %v1029, 1
    %v1031 = vadd.f32 %v1029, %v1030
    %v1032 = vmul.f32 %v1031, 0.001953125
    %v1033 = vsub.f32 %v990, %v1032
    %v1034 = vsub.f32 %v991, %v1032
    %v1035 = vsub.f32 %v992, %v1032
    %v1036 = vsub.f32 %v993, %v1032
    %v1037 = vmul.f32 %v1033, %v1033
    %v1038 = vmul.f32 %v1034, %v1034
    %v1039 = vmul.f32 %v1035, %v1035
    %v1040 = vmul.f32 %v1036, %v1036
    %1041 = vmatpush.msra.mxu0 %v218
    %1042 = vmatpush.msra.mxu0 %v217
    %1043 = vmatpush.msra.mxu0 %v216
    %1044 = vmatpush.msra.mxu0 %v215
    %1045 = vmatpush.msra.mxu0 %v214
    %1046 = vmatpush.msra.mxu0 %v213
    %1047 = vmatpush.msra.mxu0 %v212
    %1048 = vmatpush.msra.mxu0 %v211
    %1049 = vmatpush.msra.mxu0 %v210
    %1050 = vmatpush.msra.mxu0 %v209
    %1051 = vmatpush.msra.mxu0 %v208
    %1052 = vmatpush.msra.mxu0 %v207
    %1053 = vmatpush.msra.mxu0 %v206
    %1054 = vmatpush.msra.mxu0 %v205
    %1055 = vmatpush.msra.mxu0 %v204
    %1056 = vmatpush.msra.mxu0 %v203
    %1057 = vmatmul.f32.gmra.mxu0 %v1037
    %v1058 = vpop.f32.mrf.mxu0
    %v1059 = vadd.f32 0.0, %v1058
    %1060 = vmatmul.f32.gmra.mxu0 %v1038
    %v1061 = vpop.f32.mrf.mxu0
    %v1062 = vadd.f32 0.0, %v1061
    %1063 = vmatmul.f32.gmra.mxu0 %v1039
    %v1064 = vpop.f32.mrf.mxu0
    %v1065 = vadd.f32 0.0, %v1064
    %1066 = vmatmul.f32.gmra.mxu0 %v1040
    %v1067 = vpop.f32.mrf.mxu0
    %v1068 = vadd.f32 0.0, %v1067
    %1069 = vdwg.mxu0
    %v1070 = vadd.f32 %v1059, %v1062
    %v1071 = vadd.f32 %v1070, %v1065
    %v1072 = vadd.f32 %v1071, %v1068
    %v1073 = vrot.slane %v1072, 4
    %v1074 = vadd.f32 %v1072, %v1073
    %v1075 = vrot.slane %v1074, 2
    %v1076 = vadd.f32 %v1074, %v1075
    %v1077 = vrot.slane %v1076, 1
    %v1078 = vadd.f32 %v1076, %v1077
    %v1079 = vmul.f32 %v1078, 0.001953125
    %v1080 = vadd.f32 %v1079, 1e-05
    %v1081 = vrsqrt.pop %v1080
    %v1082 = vmul.f32 %v1081, %v1080
    %v1083 = vmul.f32 %v1082, %v1081
    %v1084 = vmul.f32 0.5, %v1083
    %v1085 = vsub.f32 1.5, %v1084
    %v1086 = vmul.f32 %v1081, %v1085
    %vm1087 = vweird.f32 %v1080
    %vm1088 = vweird.f32 %v1081
    %vm1089 = vmor %vm1087, %vm1088
    %v1090 = vsel %vm1089, %v1081, %v1086
    %v1091 = vmul.f32 %v1033, %v1090
    %v1092 = vmul.f32 %v1034, %v1090
    %v1093 = vmul.f32 %v1035, %v1090
    %v1094 = vmul.f32 %v1036, %v1090
    %v1095 = vld [vmem:[%s11] sm:$0x1]
    %v1097 = vperm.slane %v1095, 0
    %v1099 = vmul.f32 %v1091, %v1097
    %v1100 = vmul.f32 %v1092, %v1097
    %v1101 = vmul.f32 %v1093, %v1097
    %v1102 = vmul.f32 %v1094, %v1097
    %v1103 = vld [vmem:[%s12] sm:$0x1]
    %v1105 = vperm.slane %v1103, 0
    %v1107 = vadd.f32 %v1099, %v1105
    %v1108 = vadd.f32 %v1100, %v1105
    %v1109 = vadd.f32 %v1101, %v1105
    %v1110 = vadd.f32 %v1102, %v1105
    %1111 = vmatpush.msra.mxu0 %v790
    %1112 = vmatpush.msra.mxu0 %v789
    %1113 = vmatpush.msra.mxu0 %v788
    %1114 = vmatpush.msra.mxu0 %v787
    %1115 = vmatpush.msra.mxu0 %v786
    %1116 = vmatpush.msra.mxu0 %v785
    %1117 = vmatpush.msra.mxu0 %v784
    %1118 = vmatpush.msra.mxu0 %v783
    %1119 = vmatpush.msra.mxu0 %v782
    %1120 = vmatpush.msra.mxu0 %v781
    %1121 = vmatpush.msra.mxu0 %v780
    %1122 = vmatpush.msra.mxu0 %v779
    %1123 = vmatpush.msra.mxu0 %v778
    %1124 = vmatpush.msra.mxu0 %v777
    %1125 = vmatpush.msra.mxu0 %v776
    %1126 = vmatpush.msra.mxu0 %v775
    %1127 = vmatmul.f32.gmra.mxu0 %v764
    %v1128 = vpop.f32.mrf.mxu0
    %v1129 = vadd.f32 %v1107, %v1128
    %1130 = vmatmul.f32.gmra.mxu0 %v767
    %v1131 = vpop.f32.mrf.mxu0
    %v1132 = vadd.f32 %v1108, %v1131
    %1133 = vmatmul.f32.gmra.mxu0 %v770
    %v1134 = vpop.f32.mrf.mxu0
    %v1135 = vadd.f32 %v1109, %v1134
    %1136 = vmatmul.f32.gmra.mxu0 %v773
    %v1137 = vpop.f32.mrf.mxu0
    %v1138 = vadd.f32 %v1110, %v1137
    %1139 = vdwg.mxu0
    %v1140 = vadd.f32 %v1129, %v726
    %v1141 = vadd.f32 %v1132, %v727
    %v1142 = vadd.f32 %v1135, %v728
    %v1143 = vadd.f32 %v1138, %v729
    %1144 = vst [vmem:[#allocation17] sm:$0xff] %v1140
    %1145 = vst [vmem:[#allocation17 + $0x8] sm:$0xff] %v1141
    %1146 = vst [vmem:[#allocation17 + $0x10] sm:$0xff] %v1142
    %1147 = vst [vmem:[#allocation17 + $0x18] sm:$0xff] %v1143
    // Predicated region
    $region98: #{tpu_custom_call.1} parent=1 // pred_check
      _
    $region99: #{tpu_custom_call.1} parent=1 // pred_check_branch
      %1149 = sbr.rel (0) target = $region101
    $region100: #{tpu_custom_call.1} parent=1 // pred_region
      %1151 = vsyncadd [#allocation4], 0
      %s1152 = sshll.u32 [#allocation17], 4
      %s1153 = int_to_ptr.vmem [resolvable:$true] %s1152
      %s1154 = sshll.u32 %s15, 4
      %s1155 = int_to_ptr.hbm [resolvable:$true] %s1154
      %1160 = dma.vmem_to_hbm [thread:$0]  %s1153, 512, %s1155, [#allocation4], 128, 128, 8
    $region101: #{tpu_custom_call.1} parent=1 // pred_fallthru
      _
    // Predicated region
    $region102: #{tpu_custom_call.1} parent=1 // pred_check
      _
    $region103: #{tpu_custom_call.1} parent=1 // pred_check_branch
      %1162 = sbr.rel (0) target = $region105
    $region104: #{tpu_custom_call.1} parent=1 // pred_region
      %1164 = dma.done [#allocation4], 512
    $region105: #{tpu_custom_call.1} parent=1 // pred_fallthru
      _
    %1165 = vsyncpa [#allocation3], 1
    %1166 = vsyncpa [#allocation6], 1
    %1167 = vsyncpa [#allocation9], 1
    %1168 = vsyncpa [#allocation12], 1
    %1169 = vsyncpa [#allocation15], 1
    %1170 = vsyncpa [#allocation4], 1

</llo_original>
